<compile_context>
chip_gen: v7x
topology: tpu7x:2x2x1
jax: 0.10.0
libtpu: 0.0.40
codegen_flags: <defaults>
</compile_context>

<pallas_src>
import jax
import jax.numpy as jnp
from jax import lax
from jax.experimental import pallas as pl
from jax.experimental.pallas import tpu as pltpu


def _lstm_attn_kernel(x_ref, feat_ref, w_ih_ref, w_hh_ref, b_ref,
                      w1hf_ref, w1hb_ref, w1x_ref, b1_ref,
                      w2_ref, b2_ref, w3_ref, b3_ref, w4_ref, b4_ref,
                      out_ref, xp_ref):
    # x_ref   : (S*B, E)    flattened time-major embeddings (row t*B+b = emb[t,b])
    # w_ih_ref: (E, 8H)     [W_ih_f.T | W_ih_b.T], i/f/o columns pre-scaled by 0.5
    # w_hh_ref: (H, 8H)     [W_hh_f.T | W_hh_b.T], i/f/o columns pre-scaled by 0.5
    # b_ref   : (1, 8H)     [b_f | b_b] (b_ih + b_hh), i/f/o entries pre-scaled by 0.5
    # xp_ref  : (S, 2B, 4H) VMEM scratch holding the hoisted per-step input projection
    S, B2, H4 = xp_ref.shape
    B = B2 // 2
    H = H4 // 4

    # ---- Hoisted input projection: ONE matmul, biases folded in, fully off
    #      the serial h->h critical path. ---------------------------------
    proj = jnp.dot(x_ref[...], w_ih_ref[...],
                   preferred_element_type=jnp.float32) + b_ref[...]     # (S*B, 8H)
    # Scatter into the per-step [fwd ; bwd] row stack (static Python loop,
    # runs once before the recurrence).  fwd rows use emb[t] with the forward
    # columns, bwd rows use emb[S-1-t] with the backward columns.
    for t in range(S):
        xp_ref[t, :B, :] = proj[t * B:(t + 1) * B, :H4]
        xp_ref[t, B:, :] = proj[(S - 1 - t) * B:(S - t) * B, H4:]

    # ---- Recurrence: per step only h @ W_hh (K = H) + xp[t] remains. -----
    w_hh = w_hh_ref[...]                                    # loop-invariant
    fwd_rows = lax.broadcasted_iota(jnp.int32, (B2, H4), 0) < B

    def step(t, carry):
        h, c = carry                                        # (2B, H) each
        rec = jnp.dot(h, w_hh, preferred_element_type=jnp.float32)      # (2B, 8H)
        # fwd rows take lanes 0:4H, bwd rows take lanes 4H:8H; both halves are
        # full-vreg aligned -> one vselect, no relayout.  Add the hoisted
        # input projection (bias already folded in).
        pre = jnp.where(fwd_rows, rec[:, :H4], rec[:, H4:]) + xp_ref[t]
        # Single full-width EUP push: i/f/o columns were pre-scaled by 0.5, so
        # sigmoid(x) = 0.5*tanh(x/2) + 0.5 comes out of the same tanh stream
        # that produces the g gate.  (PyTorch gate order i, f, g, o.)
        tt = jnp.tanh(pre)
        i_g = 0.5 * tt[:, 0:H] + 0.5
        f_g = 0.5 * tt[:, H:2 * H] + 0.5
        g_g = tt[:, 2 * H:3 * H]
        o_g = 0.5 * tt[:, 3 * H:4 * H] + 0.5
        c_new = f_g * c + i_g * g_g
        h_new = o_g * jnp.tanh(c_new)
        return h_new, c_new

    h0 = jnp.zeros((B2, H), jnp.float32)
    c0 = jnp.zeros((B2, H), jnp.float32)
    # S is small and static here; guard the full unroll for larger S so the
    # serial chain does not blow the vreg budget.
    h_final, _ = lax.fori_loop(0, S, step, (h0, c0),
                               unroll=True if S <= 16 else 8)

    # ---- Epilogue: rows 0:B == hidden[-2] (fwd), rows B:2B == hidden[-1] (bwd).
    # fc1 as split matmuls summed (no unaligned lane concat).
    h_f = h_final[:B]
    h_b = h_final[B:]
    z1 = (jnp.dot(h_f, w1hf_ref[...], preferred_element_type=jnp.float32)
          + jnp.dot(h_b, w1hb_ref[...], preferred_element_type=jnp.float32)
          + jnp.dot(feat_ref[...], w1x_ref[...], preferred_element_type=jnp.float32)
          + b1_ref[...])
    o1 = jnp.tanh(z1)
    o2 = jnp.tanh(jnp.dot(o1, w2_ref[...],
                          preferred_element_type=jnp.float32) + b2_ref[...])
    o3 = jnp.tanh(jnp.dot(o2, w3_ref[...],
                          preferred_element_type=jnp.float32) + b3_ref[...])
    out_ref[...] = (jnp.dot(o3, w4_ref[...],
                            preferred_element_type=jnp.float32) + b4_ref[...])


def init_params(key, vocab, emb_dim, hidden, feat_dim, unit_num, num_class):
    ks = jax.random.split(key, 17)
    u = lambda k, shape: jax.random.uniform(k, shape, jnp.float32, -0.5, 0.5)
    H = hidden
    return dict(
        embedding=u(ks[0], (vocab, emb_dim)),
        # LSTM forward direction (PyTorch layout: weight (4H, in))
        w_ih_f=u(ks[1], (4 * H, emb_dim)), w_hh_f=u(ks[2], (4 * H, H)),
        b_ih_f=u(ks[3], (4 * H,)),         b_hh_f=u(ks[4], (4 * H,)),
        # LSTM backward direction
        w_ih_b=u(ks[5], (4 * H, emb_dim)), w_hh_b=u(ks[6], (4 * H, H)),
        b_ih_b=u(ks[7], (4 * H,)),         b_hh_b=u(ks[8], (4 * H,)),
        # fc stack (PyTorch nn.Linear layout: (out, in)); fc1 in = 2H + F
        w1=u(ks[9], (unit_num, 2 * H + feat_dim)), b1=u(ks[10], (unit_num,)),
        w2=u(ks[11], (unit_num, unit_num)),        b2=u(ks[12], (unit_num,)),
        w3=u(ks[13], (unit_num, unit_num)),        b3=u(ks[14], (unit_num,)),
        w4=u(ks[15], (num_class, unit_num)),       b4=u(ks[16], (num_class,)),
    )


def lstm_attention_forward(text, features, p):
    # text: (S, B) int32 token ids (time-major, batch_first=False)
    # features: (B, F) float32
    S, B = text.shape
    H = p['w_hh_f'].shape[1]
    E = p['w_ih_f'].shape[1]
    C = p['w4'].shape[0]
    H4 = 4 * H

    # TODO(synk): at realistic S*B*E, fuse this gather in-kernel (token ids via
    # scalar prefetch, embedding table left in HBM with memory_space=pl.ANY and
    # manual double-buffered DMA) instead of materializing emb through HBM.
    emb = p['embedding'][text].astype(jnp.float32)            # (S, B, E)
    x2d = emb.reshape(S * B, E)                               # single emb stream (no fwd/bwd dup)

    # Fused gate weights: columns 0:4H forward, 4H:8H backward.
    w_ih_wide = jnp.concatenate([p['w_ih_f'].T, p['w_ih_b'].T], axis=1)   # (E, 8H)
    w_hh_wide = jnp.concatenate([p['w_hh_f'].T, p['w_hh_b'].T], axis=1)   # (H, 8H)
    b_f = p['b_ih_f'] + p['b_hh_f']
    b_b = p['b_ih_b'] + p['b_hh_b']
    b_wide = jnp.concatenate([b_f, b_b])[None, :]                         # (1, 8H)

    # Pre-scale i/f/o gate columns by 0.5 so the kernel computes
    # sigmoid(x) = 0.5*tanh(x/2) + 0.5 from a single tanh stream (g stays tanh).
    half = jnp.full((H,), 0.5, jnp.float32)
    one = jnp.ones((H,), jnp.float32)
    scale4 = jnp.concatenate([half, half, one, half])                     # i, f, g, o
    scale8 = jnp.concatenate([scale4, scale4])                            # (8H,)
    w_ih_wide = w_ih_wide * scale8[None, :]
    w_hh_wide = w_hh_wide * scale8[None, :]
    b_wide = b_wide * scale8[None, :]

    # fc1 split row-wise: [h_fwd | h_bwd | features] contributions as 3 matmuls.
    w1t = p['w1'].T                                                       # (2H+F, U)
    w1_hf = w1t[:H]
    w1_hb = w1t[H:2 * H]
    w1_x = w1t[2 * H:]
    b1 = p['b1'][None, :]
    w2 = p['w2'].T; b2 = p['b2'][None, :]
    w3 = p['w3'].T; b3 = p['b3'][None, :]
    w4 = p['w4'].T; b4 = p['b4'][None, :]

    args = (x2d, features, w_ih_wide, w_hh_wide, b_wide,
            w1_hf, w1_hb, w1_x, b1, w2, b2, w3, b3, w4, b4)
    vmem = pl.BlockSpec(memory_space=pltpu.MemorySpace.VMEM)
    # Toy sizes: everything resident in VMEM, single grid point.  At realistic
    # S/B, grid over time ("arbitrary" axis, h/c in scratch, Buffered x blocks)
    # and add a "parallel" batch axis to use v7x's second TensorCore.
    return pl.pallas_call(
        _lstm_attn_kernel,
        out_shape=jax.ShapeDtypeStruct((B, C), jnp.float32),
        in_specs=[vmem] * len(args),
        out_specs=vmem,
        scratch_shapes=[pltpu.VMEM((S, 2 * B, H4), jnp.float32)],
    )(*args)


def reference_forward(text, features, p):
    """Pure-JAX reference mirroring the PyTorch forward (for correctness check)."""
    dot = lambda a, b: jnp.dot(a, b, precision=jax.lax.Precision.HIGHEST)
    emb = p['embedding'][text].astype(jnp.float32)
    S, B = text.shape
    H = p['w_hh_f'].shape[1]

    def cell(x, h, c, wih, whh, b):
        g = dot(x, wih.T) + dot(h, whh.T) + b
        i = jax.nn.sigmoid(g[:, :H]); f = jax.nn.sigmoid(g[:, H:2 * H])
        gg = jnp.tanh(g[:, 2 * H:3 * H]); o = jax.nn.sigmoid(g[:, 3 * H:])
        c = f * c + i * gg
        return o * jnp.tanh(c), c

    bf = p['b_ih_f'] + p['b_hh_f']
    bb = p['b_ih_b'] + p['b_hh_b']
    h = jnp.zeros((B, H), jnp.float32); c = jnp.zeros((B, H), jnp.float32)
    for t in range(S):
        h, c = cell(emb[t], h, c, p['w_ih_f'], p['w_hh_f'], bf)
    h_fwd = h
    h = jnp.zeros((B, H), jnp.float32); c = jnp.zeros((B, H), jnp.float32)
    for t in reversed(range(S)):
        h, c = cell(emb[t], h, c, p['w_ih_b'], p['w_hh_b'], bb)
    h_bwd = h

    x = jnp.concatenate([h_fwd, h_bwd, features], axis=1)
    o1 = jnp.tanh(dot(x, p['w1'].T) + p['b1'])
    o2 = jnp.tanh(dot(o1, p['w2'].T) + p['b2'])
    o3 = jnp.tanh(dot(o2, p['w3'].T) + p['b3'])
    return dot(o3, p['w4'].T) + p['b4']


if __name__ == "__main__":
    # Small shapes consistent with the module.
    S, B = 8, 4          # seq_len, batch
    V, E = 20, 32        # vocab size, embedding_dim
    H = 32               # hidden_size
    F = 8                # input_unit_num (extra features)
    U = 32               # unit_num
    C = 4                # num_class

    key = jax.random.PRNGKey(0)
    k_par, k_txt, k_feat = jax.random.split(key, 3)

    params = init_params(k_par, V, E, H, F, U, C)
    text = jax.random.randint(k_txt, (S, B), 0, V, dtype=jnp.int32)
    feats = jax.random.normal(k_feat, (B, F), dtype=jnp.float32) * 0.5

    fwd = jax.jit(lstm_attention_forward)
    out = fwd(text, feats, params)
    ref = reference_forward(text, feats, params)
    jax.block_until_ready((out, ref))

    assert out.shape == (B, C)
    err = float(jnp.max(jnp.abs(out - ref)))
    scale = float(jnp.max(jnp.abs(ref))) + 1e-6
    # Tight tolerance (both sides are full-f32 arithmetic) so layout/indexing
    # regressions are actually caught; relax only if bf16 weights are adopted.
    assert err / scale < 1e-4, f"kernel/reference mismatch: err={err}, scale={scale}"
    print("KERNEL_OK")
</pallas_src>

<mosaic_0001>
module attributes {stable_mosaic.version = 11 : i64} {
  func.func @_lstm_attn_kernel(%arg0: memref<32x32xf32, #tpu.memory_space<vmem>>, %arg1: memref<4x8xf32, #tpu.memory_space<vmem>>, %arg2: memref<32x256xf32, #tpu.memory_space<vmem>>, %arg3: memref<32x256xf32, #tpu.memory_space<vmem>>, %arg4: memref<1x256xf32, #tpu.memory_space<vmem>>, %arg5: memref<32x32xf32, #tpu.memory_space<vmem>>, %arg6: memref<32x32xf32, #tpu.memory_space<vmem>>, %arg7: memref<8x32xf32, #tpu.memory_space<vmem>>, %arg8: memref<1x32xf32, #tpu.memory_space<vmem>>, %arg9: memref<32x32xf32, #tpu.memory_space<vmem>>, %arg10: memref<1x32xf32, #tpu.memory_space<vmem>>, %arg11: memref<32x32xf32, #tpu.memory_space<vmem>>, %arg12: memref<1x32xf32, #tpu.memory_space<vmem>>, %arg13: memref<32x4xf32, #tpu.memory_space<vmem>>, %arg14: memref<1x4xf32, #tpu.memory_space<vmem>>, %arg15: memref<4x4xf32, #tpu.memory_space<vmem>>, %arg16: memref<8x8x128xf32, #tpu.memory_space<vmem>>) attributes {dimension_semantics = [], scalar_prefetch = 0 : i64, scratch_operands = 1 : i64, tpu.core_type = #tpu.core_type<tc>} {
    %c0 = arith.constant 0 : index
    %c0_0 = arith.constant 0 : index
    %0 = vector.load %arg0[%c0, %c0_0] : memref<32x32xf32, #tpu.memory_space<vmem>>, vector<32x32xf32>
    %c0_1 = arith.constant 0 : index
    %c0_2 = arith.constant 0 : index
    %1 = vector.load %arg2[%c0_1, %c0_2] : memref<32x256xf32, #tpu.memory_space<vmem>>, vector<32x256xf32>
    %cst = arith.constant dense<0.000000e+00> : vector<32x256xf32>
    %2 = tpu.matmul %0, %1, %cst {dimension_numbers = #tpu.dot_dimension_numbers<[1], [0], [0], [1], [0, 0, 1, 1], [], []>} : vector<32x32xf32>, vector<32x256xf32>, vector<32x256xf32> -> vector<32x256xf32>
    %c0_3 = arith.constant 0 : index
    %c0_4 = arith.constant 0 : index
    %3 = vector.load %arg4[%c0_3, %c0_4] : memref<1x256xf32, #tpu.memory_space<vmem>>, vector<1x256xf32>
    %4 = vector.broadcast %3 : vector<1x256xf32> to vector<32x256xf32>
    %5 = arith.addf %2, %4 : vector<32x256xf32>
    %6 = vector.extract_strided_slice %5 {offsets = [0, 0], sizes = [4, 128], strides = [1, 1]} : vector<32x256xf32> to vector<4x128xf32>
    %c0_5 = arith.constant 0 : index
    %c0_6 = arith.constant 0 : index
    %c0_7 = arith.constant 0 : index
    %7 = vector.load %arg16[%c0_5, %c0_6, %c0_7] : memref<8x8x128xf32, #tpu.memory_space<vmem>>, vector<1x4x128xf32>
    %8 = vector.shape_cast %7 : vector<1x4x128xf32> to vector<4x128xf32>
    %9 = vector.shape_cast %6 : vector<4x128xf32> to vector<1x4x128xf32>
    tpu.vector_store %arg16[%c0_5, %c0_6, %c0_7], %9 {strides = array<i32>} : memref<8x8x128xf32, #tpu.memory_space<vmem>>, vector<1x4x128xf32>,
    %10 = vector.extract_strided_slice %5 {offsets = [28, 128], sizes = [4, 128], strides = [1, 1]} : vector<32x256xf32> to vector<4x128xf32>
    %c0_8 = arith.constant 0 : index
    %c4 = arith.constant 4 : index
    %c0_9 = arith.constant 0 : index
    %11 = vector.load %arg16[%c0_8, %c4, %c0_9] : memref<8x8x128xf32, #tpu.memory_space<vmem>>, vector<1x4x128xf32>
    %12 = vector.shape_cast %11 : vector<1x4x128xf32> to vector<4x128xf32>
    %13 = vector.shape_cast %10 : vector<4x128xf32> to vector<1x4x128xf32>
    tpu.vector_store %arg16[%c0_8, %c4, %c0_9], %13 {strides = array<i32>} : memref<8x8x128xf32, #tpu.memory_space<vmem>>, vector<1x4x128xf32>,
    %14 = vector.extract_strided_slice %5 {offsets = [4, 0], sizes = [4, 128], strides = [1, 1]} : vector<32x256xf32> to vector<4x128xf32>
    %c1 = arith.constant 1 : index
    %c0_10 = arith.constant 0 : index
    %c0_11 = arith.constant 0 : index
    %15 = vector.load %arg16[%c1, %c0_10, %c0_11] : memref<8x8x128xf32, #tpu.memory_space<vmem>>, vector<1x4x128xf32>
    %16 = vector.shape_cast %15 : vector<1x4x128xf32> to vector<4x128xf32>
    %17 = vector.shape_cast %14 : vector<4x128xf32> to vector<1x4x128xf32>
    tpu.vector_store %arg16[%c1, %c0_10, %c0_11], %17 {strides = array<i32>} : memref<8x8x128xf32, #tpu.memory_space<vmem>>, vector<1x4x128xf32>,
    %18 = vector.extract_strided_slice %5 {offsets = [24, 128], sizes = [4, 128], strides = [1, 1]} : vector<32x256xf32> to vector<4x128xf32>
    %c1_12 = arith.constant 1 : index
    %c4_13 = arith.constant 4 : index
    %c0_14 = arith.constant 0 : index
    %19 = vector.load %arg16[%c1_12, %c4_13, %c0_14] : memref<8x8x128xf32, #tpu.memory_space<vmem>>, vector<1x4x128xf32>
    %20 = vector.shape_cast %19 : vector<1x4x128xf32> to vector<4x128xf32>
    %21 = vector.shape_cast %18 : vector<4x128xf32> to vector<1x4x128xf32>
    tpu.vector_store %arg16[%c1_12, %c4_13, %c0_14], %21 {strides = array<i32>} : memref<8x8x128xf32, #tpu.memory_space<vmem>>, vector<1x4x128xf32>,
    %22 = vector.extract_strided_slice %5 {offsets = [8, 0], sizes = [4, 128], strides = [1, 1]} : vector<32x256xf32> to vector<4x128xf32>
    %c2 = arith.constant 2 : index
    %c0_15 = arith.constant 0 : index
    %c0_16 = arith.constant 0 : index
    %23 = vector.load %arg16[%c2, %c0_15, %c0_16] : memref<8x8x128xf32, #tpu.memory_space<vmem>>, vector<1x4x128xf32>
    %24 = vector.shape_cast %23 : vector<1x4x128xf32> to vector<4x128xf32>
    %25 = vector.shape_cast %22 : vector<4x128xf32> to vector<1x4x128xf32>
    tpu.vector_store %arg16[%c2, %c0_15, %c0_16], %25 {strides = array<i32>} : memref<8x8x128xf32, #tpu.memory_space<vmem>>, vector<1x4x128xf32>,
    %26 = vector.extract_strided_slice %5 {offsets = [20, 128], sizes = [4, 128], strides = [1, 1]} : vector<32x256xf32> to vector<4x128xf32>
    %c2_17 = arith.constant 2 : index
    %c4_18 = arith.constant 4 : index
    %c0_19 = arith.constant 0 : index
    %27 = vector.load %arg16[%c2_17, %c4_18, %c0_19] : memref<8x8x128xf32, #tpu.memory_space<vmem>>, vector<1x4x128xf32>
    %28 = vector.shape_cast %27 : vector<1x4x128xf32> to vector<4x128xf32>
    %29 = vector.shape_cast %26 : vector<4x128xf32> to vector<1x4x128xf32>
    tpu.vector_store %arg16[%c2_17, %c4_18, %c0_19], %29 {strides = array<i32>} : memref<8x8x128xf32, #tpu.memory_space<vmem>>, vector<1x4x128xf32>,
    %30 = vector.extract_strided_slice %5 {offsets = [12, 0], sizes = [4, 128], strides = [1, 1]} : vector<32x256xf32> to vector<4x128xf32>
    %c3 = arith.constant 3 : index
    %c0_20 = arith.constant 0 : index
    %c0_21 = arith.constant 0 : index
    %31 = vector.load %arg16[%c3, %c0_20, %c0_21] : memref<8x8x128xf32, #tpu.memory_space<vmem>>, vector<1x4x128xf32>
    %32 = vector.shape_cast %31 : vector<1x4x128xf32> to vector<4x128xf32>
    %33 = vector.shape_cast %30 : vector<4x128xf32> to vector<1x4x128xf32>
    tpu.vector_store %arg16[%c3, %c0_20, %c0_21], %33 {strides = array<i32>} : memref<8x8x128xf32, #tpu.memory_space<vmem>>, vector<1x4x128xf32>,
    %34 = vector.extract_strided_slice %5 {offsets = [16, 128], sizes = [4, 128], strides = [1, 1]} : vector<32x256xf32> to vector<4x128xf32>
    %c3_22 = arith.constant 3 : index
    %c4_23 = arith.constant 4 : index
    %c0_24 = arith.constant 0 : index
    %35 = vector.load %arg16[%c3_22, %c4_23, %c0_24] : memref<8x8x128xf32, #tpu.memory_space<vmem>>, vector<1x4x128xf32>
    %36 = vector.shape_cast %35 : vector<1x4x128xf32> to vector<4x128xf32>
    %37 = vector.shape_cast %34 : vector<4x128xf32> to vector<1x4x128xf32>
    tpu.vector_store %arg16[%c3_22, %c4_23, %c0_24], %37 {strides = array<i32>} : memref<8x8x128xf32, #tpu.memory_space<vmem>>, vector<1x4x128xf32>,
    %38 = vector.extract_strided_slice %5 {offsets = [16, 0], sizes = [4, 128], strides = [1, 1]} : vector<32x256xf32> to vector<4x128xf32>
    %c4_25 = arith.constant 4 : index
    %c0_26 = arith.constant 0 : index
    %c0_27 = arith.constant 0 : index
    %39 = vector.load %arg16[%c4_25, %c0_26, %c0_27] : memref<8x8x128xf32, #tpu.memory_space<vmem>>, vector<1x4x128xf32>
    %40 = vector.shape_cast %39 : vector<1x4x128xf32> to vector<4x128xf32>
    %41 = vector.shape_cast %38 : vector<4x128xf32> to vector<1x4x128xf32>
    tpu.vector_store %arg16[%c4_25, %c0_26, %c0_27], %41 {strides = array<i32>} : memref<8x8x128xf32, #tpu.memory_space<vmem>>, vector<1x4x128xf32>,
    %42 = vector.extract_strided_slice %5 {offsets = [12, 128], sizes = [4, 128], strides = [1, 1]} : vector<32x256xf32> to vector<4x128xf32>
    %c4_28 = arith.constant 4 : index
    %c4_29 = arith.constant 4 : index
    %c0_30 = arith.constant 0 : index
    %43 = vector.load %arg16[%c4_28, %c4_29, %c0_30] : memref<8x8x128xf32, #tpu.memory_space<vmem>>, vector<1x4x128xf32>
    %44 = vector.shape_cast %43 : vector<1x4x128xf32> to vector<4x128xf32>
    %45 = vector.shape_cast %42 : vector<4x128xf32> to vector<1x4x128xf32>
    tpu.vector_store %arg16[%c4_28, %c4_29, %c0_30], %45 {strides = array<i32>} : memref<8x8x128xf32, #tpu.memory_space<vmem>>, vector<1x4x128xf32>,
    %46 = vector.extract_strided_slice %5 {offsets = [20, 0], sizes = [4, 128], strides = [1, 1]} : vector<32x256xf32> to vector<4x128xf32>
    %c5 = arith.constant 5 : index
    %c0_31 = arith.constant 0 : index
    %c0_32 = arith.constant 0 : index
    %47 = vector.load %arg16[%c5, %c0_31, %c0_32] : memref<8x8x128xf32, #tpu.memory_space<vmem>>, vector<1x4x128xf32>
    %48 = vector.shape_cast %47 : vector<1x4x128xf32> to vector<4x128xf32>
    %49 = vector.shape_cast %46 : vector<4x128xf32> to vector<1x4x128xf32>
    tpu.vector_store %arg16[%c5, %c0_31, %c0_32], %49 {strides = array<i32>} : memref<8x8x128xf32, #tpu.memory_space<vmem>>, vector<1x4x128xf32>,
    %50 = vector.extract_strided_slice %5 {offsets = [8, 128], sizes = [4, 128], strides = [1, 1]} : vector<32x256xf32> to vector<4x128xf32>
    %c5_33 = arith.constant 5 : index
    %c4_34 = arith.constant 4 : index
    %c0_35 = arith.constant 0 : index
    %51 = vector.load %arg16[%c5_33, %c4_34, %c0_35] : memref<8x8x128xf32, #tpu.memory_space<vmem>>, vector<1x4x128xf32>
    %52 = vector.shape_cast %51 : vector<1x4x128xf32> to vector<4x128xf32>
    %53 = vector.shape_cast %50 : vector<4x128xf32> to vector<1x4x128xf32>
    tpu.vector_store %arg16[%c5_33, %c4_34, %c0_35], %53 {strides = array<i32>} : memref<8x8x128xf32, #tpu.memory_space<vmem>>, vector<1x4x128xf32>,
    %54 = vector.extract_strided_slice %5 {offsets = [24, 0], sizes = [4, 128], strides = [1, 1]} : vector<32x256xf32> to vector<4x128xf32>
    %c6 = arith.constant 6 : index
    %c0_36 = arith.constant 0 : index
    %c0_37 = arith.constant 0 : index
    %55 = vector.load %arg16[%c6, %c0_36, %c0_37] : memref<8x8x128xf32, #tpu.memory_space<vmem>>, vector<1x4x128xf32>
    %56 = vector.shape_cast %55 : vector<1x4x128xf32> to vector<4x128xf32>
    %57 = vector.shape_cast %54 : vector<4x128xf32> to vector<1x4x128xf32>
    tpu.vector_store %arg16[%c6, %c0_36, %c0_37], %57 {strides = array<i32>} : memref<8x8x128xf32, #tpu.memory_space<vmem>>, vector<1x4x128xf32>,
    %58 = vector.extract_strided_slice %5 {offsets = [4, 128], sizes = [4, 128], strides = [1, 1]} : vector<32x256xf32> to vector<4x128xf32>
    %c6_38 = arith.constant 6 : index
    %c4_39 = arith.constant 4 : index
    %c0_40 = arith.constant 0 : index
    %59 = vector.load %arg16[%c6_38, %c4_39, %c0_40] : memref<8x8x128xf32, #tpu.memory_space<vmem>>, vector<1x4x128xf32>
    %60 = vector.shape_cast %59 : vector<1x4x128xf32> to vector<4x128xf32>
    %61 = vector.shape_cast %58 : vector<4x128xf32> to vector<1x4x128xf32>
    tpu.vector_store %arg16[%c6_38, %c4_39, %c0_40], %61 {strides = array<i32>} : memref<8x8x128xf32, #tpu.memory_space<vmem>>, vector<1x4x128xf32>,
    %62 = vector.extract_strided_slice %5 {offsets = [28, 0], sizes = [4, 128], strides = [1, 1]} : vector<32x256xf32> to vector<4x128xf32>
    %c7 = arith.constant 7 : index
    %c0_41 = arith.constant 0 : index
    %c0_42 = arith.constant 0 : index
    %63 = vector.load %arg16[%c7, %c0_41, %c0_42] : memref<8x8x128xf32, #tpu.memory_space<vmem>>, vector<1x4x128xf32>
    %64 = vector.shape_cast %63 : vector<1x4x128xf32> to vector<4x128xf32>
    %65 = vector.shape_cast %62 : vector<4x128xf32> to vector<1x4x128xf32>
    tpu.vector_store %arg16[%c7, %c0_41, %c0_42], %65 {strides = array<i32>} : memref<8x8x128xf32, #tpu.memory_space<vmem>>, vector<1x4x128xf32>,
    %66 = vector.extract_strided_slice %5 {offsets = [0, 128], sizes = [4, 128], strides = [1, 1]} : vector<32x256xf32> to vector<4x128xf32>
    %c7_43 = arith.constant 7 : index
    %c4_44 = arith.constant 4 : index
    %c0_45 = arith.constant 0 : index
    %67 = vector.load %arg16[%c7_43, %c4_44, %c0_45] : memref<8x8x128xf32, #tpu.memory_space<vmem>>, vector<1x4x128xf32>
    %68 = vector.shape_cast %67 : vector<1x4x128xf32> to vector<4x128xf32>
    %69 = vector.shape_cast %66 : vector<4x128xf32> to vector<1x4x128xf32>
    tpu.vector_store %arg16[%c7_43, %c4_44, %c0_45], %69 {strides = array<i32>} : memref<8x8x128xf32, #tpu.memory_space<vmem>>, vector<1x4x128xf32>,
    %c0_46 = arith.constant 0 : index
    %c0_47 = arith.constant 0 : index
    %70 = vector.load %arg3[%c0_46, %c0_47] : memref<32x256xf32, #tpu.memory_space<vmem>>, vector<32x256xf32>
    %71 = tpu.iota {dimensions = array<i32: 0>} : vector<8x128xi32>
    %c4_i32 = arith.constant 4 : i32
    %72 = vector.broadcast %c4_i32 : i32 to vector<8x128xi32>
    %73 = arith.cmpi slt, %71, %72 : vector<8x128xi32>
    %cst_48 = arith.constant 0.000000e+00 : f32
    %74 = vector.broadcast %cst_48 : f32 to vector<8x32xf32>
    %cst_49 = arith.constant 0.000000e+00 : f32
    %75 = vector.broadcast %cst_49 : f32 to vector<8x32xf32>
    %c0_i32 = arith.constant 0 : i32
    %cst_50 = arith.constant dense<0.000000e+00> : vector<8x256xf32>
    %76 = tpu.matmul %74, %70, %cst_50 {dimension_numbers = #tpu.dot_dimension_numbers<[1], [0], [0], [1], [0, 0, 1, 1], [], []>} : vector<8x32xf32>, vector<32x256xf32>, vector<8x256xf32> -> vector<8x256xf32>
    %77 = vector.extract_strided_slice %76 {offsets = [0, 0], sizes = [8, 128], strides = [1, 1]} : vector<8x256xf32> to vector<8x128xf32>
    %78 = vector.extract_strided_slice %76 {offsets = [0, 128], sizes = [8, 128], strides = [1, 1]} : vector<8x256xf32> to vector<8x128xf32>
    %79 = arith.select %73, %77, %78 : vector<8x128xi1>, vector<8x128xf32>
    %80 = arith.index_cast %c0_i32 : i32 to index
    %c0_51 = arith.constant 0 : index
    %c0_52 = arith.constant 0 : index
    %81 = vector.load %arg16[%80, %c0_51, %c0_52] : memref<8x8x128xf32, #tpu.memory_space<vmem>>, vector<1x8x128xf32>
    %82 = vector.shape_cast %81 : vector<1x8x128xf32> to vector<8x128xf32>
    %83 = arith.addf %79, %82 : vector<8x128xf32>
    %84 = math.tanh %83 : vector<8x128xf32>
    %85 = vector.extract_strided_slice %84 {offsets = [0, 0], sizes = [8, 32], strides = [1, 1]} : vector<8x128xf32> to vector<8x32xf32>
    %cst_53 = arith.constant 5.000000e-01 : f32
    %86 = vector.broadcast %cst_53 : f32 to vector<8x32xf32>
    %87 = arith.mulf %86, %85 : vector<8x32xf32>
    %cst_54 = arith.constant 5.000000e-01 : f32
    %88 = vector.broadcast %cst_54 : f32 to vector<8x32xf32>
    %89 = arith.addf %87, %88 : vector<8x32xf32>
    %90 = vector.extract_strided_slice %84 {offsets = [0, 32], sizes = [8, 32], strides = [1, 1]} : vector<8x128xf32> to vector<8x32xf32>
    %cst_55 = arith.constant 5.000000e-01 : f32
    %91 = vector.broadcast %cst_55 : f32 to vector<8x32xf32>
    %92 = arith.mulf %91, %90 : vector<8x32xf32>
    %cst_56 = arith.constant 5.000000e-01 : f32
    %93 = vector.broadcast %cst_56 : f32 to vector<8x32xf32>
    %94 = arith.addf %92, %93 : vector<8x32xf32>
    %95 = vector.extract_strided_slice %84 {offsets = [0, 64], sizes = [8, 32], strides = [1, 1]} : vector<8x128xf32> to vector<8x32xf32>
    %96 = vector.extract_strided_slice %84 {offsets = [0, 96], sizes = [8, 32], strides = [1, 1]} : vector<8x128xf32> to vector<8x32xf32>
    %cst_57 = arith.constant 5.000000e-01 : f32
    %97 = vector.broadcast %cst_57 : f32 to vector<8x32xf32>
    %98 = arith.mulf %97, %96 : vector<8x32xf32>
    %cst_58 = arith.constant 5.000000e-01 : f32
    %99 = vector.broadcast %cst_58 : f32 to vector<8x32xf32>
    %100 = arith.addf %98, %99 : vector<8x32xf32>
    %101 = arith.mulf %94, %75 : vector<8x32xf32>
    %102 = arith.mulf %89, %95 : vector<8x32xf32>
    %103 = arith.addf %101, %102 : vector<8x32xf32>
    %104 = math.tanh %103 : vector<8x32xf32>
    %105 = arith.mulf %100, %104 : vector<8x32xf32>
    %c1_i32 = arith.constant 1 : i32
    %cst_59 = arith.constant dense<0.000000e+00> : vector<8x256xf32>
    %106 = tpu.matmul %105, %70, %cst_59 {dimension_numbers = #tpu.dot_dimension_numbers<[1], [0], [0], [1], [0, 0, 1, 1], [], []>} : vector<8x32xf32>, vector<32x256xf32>, vector<8x256xf32> -> vector<8x256xf32>
    %107 = vector.extract_strided_slice %106 {offsets = [0, 0], sizes = [8, 128], strides = [1, 1]} : vector<8x256xf32> to vector<8x128xf32>
    %108 = vector.extract_strided_slice %106 {offsets = [0, 128], sizes = [8, 128], strides = [1, 1]} : vector<8x256xf32> to vector<8x128xf32>
    %109 = arith.select %73, %107, %108 : vector<8x128xi1>, vector<8x128xf32>
    %110 = arith.index_cast %c1_i32 : i32 to index
    %c0_60 = arith.constant 0 : index
    %c0_61 = arith.constant 0 : index
    %111 = vector.load %arg16[%110, %c0_60, %c0_61] : memref<8x8x128xf32, #tpu.memory_space<vmem>>, vector<1x8x128xf32>
    %112 = vector.shape_cast %111 : vector<1x8x128xf32> to vector<8x128xf32>
    %113 = arith.addf %109, %112 : vector<8x128xf32>
    %114 = math.tanh %113 : vector<8x128xf32>
    %115 = vector.extract_strided_slice %114 {offsets = [0, 0], sizes = [8, 32], strides = [1, 1]} : vector<8x128xf32> to vector<8x32xf32>
    %cst_62 = arith.constant 5.000000e-01 : f32
    %116 = vector.broadcast %cst_62 : f32 to vector<8x32xf32>
    %117 = arith.mulf %116, %115 : vector<8x32xf32>
    %cst_63 = arith.constant 5.000000e-01 : f32
    %118 = vector.broadcast %cst_63 : f32 to vector<8x32xf32>
    %119 = arith.addf %117, %118 : vector<8x32xf32>
    %120 = vector.extract_strided_slice %114 {offsets = [0, 32], sizes = [8, 32], strides = [1, 1]} : vector<8x128xf32> to vector<8x32xf32>
    %cst_64 = arith.constant 5.000000e-01 : f32
    %121 = vector.broadcast %cst_64 : f32 to vector<8x32xf32>
    %122 = arith.mulf %121, %120 : vector<8x32xf32>
    %cst_65 = arith.constant 5.000000e-01 : f32
    %123 = vector.broadcast %cst_65 : f32 to vector<8x32xf32>
    %124 = arith.addf %122, %123 : vector<8x32xf32>
    %125 = vector.extract_strided_slice %114 {offsets = [0, 64], sizes = [8, 32], strides = [1, 1]} : vector<8x128xf32> to vector<8x32xf32>
    %126 = vector.extract_strided_slice %114 {offsets = [0, 96], sizes = [8, 32], strides = [1, 1]} : vector<8x128xf32> to vector<8x32xf32>
    %cst_66 = arith.constant 5.000000e-01 : f32
    %127 = vector.broadcast %cst_66 : f32 to vector<8x32xf32>
    %128 = arith.mulf %127, %126 : vector<8x32xf32>
    %cst_67 = arith.constant 5.000000e-01 : f32
    %129 = vector.broadcast %cst_67 : f32 to vector<8x32xf32>
    %130 = arith.addf %128, %129 : vector<8x32xf32>
    %131 = arith.mulf %124, %103 : vector<8x32xf32>
    %132 = arith.mulf %119, %125 : vector<8x32xf32>
    %133 = arith.addf %131, %132 : vector<8x32xf32>
    %134 = math.tanh %133 : vector<8x32xf32>
    %135 = arith.mulf %130, %134 : vector<8x32xf32>
    %c2_i32 = arith.constant 2 : i32
    %cst_68 = arith.constant dense<0.000000e+00> : vector<8x256xf32>
    %136 = tpu.matmul %135, %70, %cst_68 {dimension_numbers = #tpu.dot_dimension_numbers<[1], [0], [0], [1], [0, 0, 1, 1], [], []>} : vector<8x32xf32>, vector<32x256xf32>, vector<8x256xf32> -> vector<8x256xf32>
    %137 = vector.extract_strided_slice %136 {offsets = [0, 0], sizes = [8, 128], strides = [1, 1]} : vector<8x256xf32> to vector<8x128xf32>
    %138 = vector.extract_strided_slice %136 {offsets = [0, 128], sizes = [8, 128], strides = [1, 1]} : vector<8x256xf32> to vector<8x128xf32>
    %139 = arith.select %73, %137, %138 : vector<8x128xi1>, vector<8x128xf32>
    %140 = arith.index_cast %c2_i32 : i32 to index
    %c0_69 = arith.constant 0 : index
    %c0_70 = arith.constant 0 : index
    %141 = vector.load %arg16[%140, %c0_69, %c0_70] : memref<8x8x128xf32, #tpu.memory_space<vmem>>, vector<1x8x128xf32>
    %142 = vector.shape_cast %141 : vector<1x8x128xf32> to vector<8x128xf32>
    %143 = arith.addf %139, %142 : vector<8x128xf32>
    %144 = math.tanh %143 : vector<8x128xf32>
    %145 = vector.extract_strided_slice %144 {offsets = [0, 0], sizes = [8, 32], strides = [1, 1]} : vector<8x128xf32> to vector<8x32xf32>
    %cst_71 = arith.constant 5.000000e-01 : f32
    %146 = vector.broadcast %cst_71 : f32 to vector<8x32xf32>
    %147 = arith.mulf %146, %145 : vector<8x32xf32>
    %cst_72 = arith.constant 5.000000e-01 : f32
    %148 = vector.broadcast %cst_72 : f32 to vector<8x32xf32>
    %149 = arith.addf %147, %148 : vector<8x32xf32>
    %150 = vector.extract_strided_slice %144 {offsets = [0, 32], sizes = [8, 32], strides = [1, 1]} : vector<8x128xf32> to vector<8x32xf32>
    %cst_73 = arith.constant 5.000000e-01 : f32
    %151 = vector.broadcast %cst_73 : f32 to vector<8x32xf32>
    %152 = arith.mulf %151, %150 : vector<8x32xf32>
    %cst_74 = arith.constant 5.000000e-01 : f32
    %153 = vector.broadcast %cst_74 : f32 to vector<8x32xf32>
    %154 = arith.addf %152, %153 : vector<8x32xf32>
    %155 = vector.extract_strided_slice %144 {offsets = [0, 64], sizes = [8, 32], strides = [1, 1]} : vector<8x128xf32> to vector<8x32xf32>
    %156 = vector.extract_strided_slice %144 {offsets = [0, 96], sizes = [8, 32], strides = [1, 1]} : vector<8x128xf32> to vector<8x32xf32>
    %cst_75 = arith.constant 5.000000e-01 : f32
    %157 = vector.broadcast %cst_75 : f32 to vector<8x32xf32>
    %158 = arith.mulf %157, %156 : vector<8x32xf32>
    %cst_76 = arith.constant 5.000000e-01 : f32
    %159 = vector.broadcast %cst_76 : f32 to vector<8x32xf32>
    %160 = arith.addf %158, %159 : vector<8x32xf32>
    %161 = arith.mulf %154, %133 : vector<8x32xf32>
    %162 = arith.mulf %149, %155 : vector<8x32xf32>
    %163 = arith.addf %161, %162 : vector<8x32xf32>
    %164 = math.tanh %163 : vector<8x32xf32>
    %165 = arith.mulf %160, %164 : vector<8x32xf32>
    %c3_i32 = arith.constant 3 : i32
    %cst_77 = arith.constant dense<0.000000e+00> : vector<8x256xf32>
    %166 = tpu.matmul %165, %70, %cst_77 {dimension_numbers = #tpu.dot_dimension_numbers<[1], [0], [0], [1], [0, 0, 1, 1], [], []>} : vector<8x32xf32>, vector<32x256xf32>, vector<8x256xf32> -> vector<8x256xf32>
    %167 = vector.extract_strided_slice %166 {offsets = [0, 0], sizes = [8, 128], strides = [1, 1]} : vector<8x256xf32> to vector<8x128xf32>
    %168 = vector.extract_strided_slice %166 {offsets = [0, 128], sizes = [8, 128], strides = [1, 1]} : vector<8x256xf32> to vector<8x128xf32>
    %169 = arith.select %73, %167, %168 : vector<8x128xi1>, vector<8x128xf32>
    %170 = arith.index_cast %c3_i32 : i32 to index
    %c0_78 = arith.constant 0 : index
    %c0_79 = arith.constant 0 : index
    %171 = vector.load %arg16[%170, %c0_78, %c0_79] : memref<8x8x128xf32, #tpu.memory_space<vmem>>, vector<1x8x128xf32>
    %172 = vector.shape_cast %171 : vector<1x8x128xf32> to vector<8x128xf32>
    %173 = arith.addf %169, %172 : vector<8x128xf32>
    %174 = math.tanh %173 : vector<8x128xf32>
    %175 = vector.extract_strided_slice %174 {offsets = [0, 0], sizes = [8, 32], strides = [1, 1]} : vector<8x128xf32> to vector<8x32xf32>
    %cst_80 = arith.constant 5.000000e-01 : f32
    %176 = vector.broadcast %cst_80 : f32 to vector<8x32xf32>
    %177 = arith.mulf %176, %175 : vector<8x32xf32>
    %cst_81 = arith.constant 5.000000e-01 : f32
    %178 = vector.broadcast %cst_81 : f32 to vector<8x32xf32>
    %179 = arith.addf %177, %178 : vector<8x32xf32>
    %180 = vector.extract_strided_slice %174 {offsets = [0, 32], sizes = [8, 32], strides = [1, 1]} : vector<8x128xf32> to vector<8x32xf32>
    %cst_82 = arith.constant 5.000000e-01 : f32
    %181 = vector.broadcast %cst_82 : f32 to vector<8x32xf32>
    %182 = arith.mulf %181, %180 : vector<8x32xf32>
    %cst_83 = arith.constant 5.000000e-01 : f32
    %183 = vector.broadcast %cst_83 : f32 to vector<8x32xf32>
    %184 = arith.addf %182, %183 : vector<8x32xf32>
    %185 = vector.extract_strided_slice %174 {offsets = [0, 64], sizes = [8, 32], strides = [1, 1]} : vector<8x128xf32> to vector<8x32xf32>
    %186 = vector.extract_strided_slice %174 {offsets = [0, 96], sizes = [8, 32], strides = [1, 1]} : vector<8x128xf32> to vector<8x32xf32>
    %cst_84 = arith.constant 5.000000e-01 : f32
    %187 = vector.broadcast %cst_84 : f32 to vector<8x32xf32>
    %188 = arith.mulf %187, %186 : vector<8x32xf32>
    %cst_85 = arith.constant 5.000000e-01 : f32
    %189 = vector.broadcast %cst_85 : f32 to vector<8x32xf32>
    %190 = arith.addf %188, %189 : vector<8x32xf32>
    %191 = arith.mulf %184, %163 : vector<8x32xf32>
    %192 = arith.mulf %179, %185 : vector<8x32xf32>
    %193 = arith.addf %191, %192 : vector<8x32xf32>
    %194 = math.tanh %193 : vector<8x32xf32>
    %195 = arith.mulf %190, %194 : vector<8x32xf32>
    %c4_i32_86 = arith.constant 4 : i32
    %cst_87 = arith.constant dense<0.000000e+00> : vector<8x256xf32>
    %196 = tpu.matmul %195, %70, %cst_87 {dimension_numbers = #tpu.dot_dimension_numbers<[1], [0], [0], [1], [0, 0, 1, 1], [], []>} : vector<8x32xf32>, vector<32x256xf32>, vector<8x256xf32> -> vector<8x256xf32>
    %197 = vector.extract_strided_slice %196 {offsets = [0, 0], sizes = [8, 128], strides = [1, 1]} : vector<8x256xf32> to vector<8x128xf32>
    %198 = vector.extract_strided_slice %196 {offsets = [0, 128], sizes = [8, 128], strides = [1, 1]} : vector<8x256xf32> to vector<8x128xf32>
    %199 = arith.select %73, %197, %198 : vector<8x128xi1>, vector<8x128xf32>
    %200 = arith.index_cast %c4_i32_86 : i32 to index
    %c0_88 = arith.constant 0 : index
    %c0_89 = arith.constant 0 : index
    %201 = vector.load %arg16[%200, %c0_88, %c0_89] : memref<8x8x128xf32, #tpu.memory_space<vmem>>, vector<1x8x128xf32>
    %202 = vector.shape_cast %201 : vector<1x8x128xf32> to vector<8x128xf32>
    %203 = arith.addf %199, %202 : vector<8x128xf32>
    %204 = math.tanh %203 : vector<8x128xf32>
    %205 = vector.extract_strided_slice %204 {offsets = [0, 0], sizes = [8, 32], strides = [1, 1]} : vector<8x128xf32> to vector<8x32xf32>
    %cst_90 = arith.constant 5.000000e-01 : f32
    %206 = vector.broadcast %cst_90 : f32 to vector<8x32xf32>
    %207 = arith.mulf %206, %205 : vector<8x32xf32>
    %cst_91 = arith.constant 5.000000e-01 : f32
    %208 = vector.broadcast %cst_91 : f32 to vector<8x32xf32>
    %209 = arith.addf %207, %208 : vector<8x32xf32>
    %210 = vector.extract_strided_slice %204 {offsets = [0, 32], sizes = [8, 32], strides = [1, 1]} : vector<8x128xf32> to vector<8x32xf32>
    %cst_92 = arith.constant 5.000000e-01 : f32
    %211 = vector.broadcast %cst_92 : f32 to vector<8x32xf32>
    %212 = arith.mulf %211, %210 : vector<8x32xf32>
    %cst_93 = arith.constant 5.000000e-01 : f32
    %213 = vector.broadcast %cst_93 : f32 to vector<8x32xf32>
    %214 = arith.addf %212, %213 : vector<8x32xf32>
    %215 = vector.extract_strided_slice %204 {offsets = [0, 64], sizes = [8, 32], strides = [1, 1]} : vector<8x128xf32> to vector<8x32xf32>
    %216 = vector.extract_strided_slice %204 {offsets = [0, 96], sizes = [8, 32], strides = [1, 1]} : vector<8x128xf32> to vector<8x32xf32>
    %cst_94 = arith.constant 5.000000e-01 : f32
    %217 = vector.broadcast %cst_94 : f32 to vector<8x32xf32>
    %218 = arith.mulf %217, %216 : vector<8x32xf32>
    %cst_95 = arith.constant 5.000000e-01 : f32
    %219 = vector.broadcast %cst_95 : f32 to vector<8x32xf32>
    %220 = arith.addf %218, %219 : vector<8x32xf32>
    %221 = arith.mulf %214, %193 : vector<8x32xf32>
    %222 = arith.mulf %209, %215 : vector<8x32xf32>
    %223 = arith.addf %221, %222 : vector<8x32xf32>
    %224 = math.tanh %223 : vector<8x32xf32>
    %225 = arith.mulf %220, %224 : vector<8x32xf32>
    %c5_i32 = arith.constant 5 : i32
    %cst_96 = arith.constant dense<0.000000e+00> : vector<8x256xf32>
    %226 = tpu.matmul %225, %70, %cst_96 {dimension_numbers = #tpu.dot_dimension_numbers<[1], [0], [0], [1], [0, 0, 1, 1], [], []>} : vector<8x32xf32>, vector<32x256xf32>, vector<8x256xf32> -> vector<8x256xf32>
    %227 = vector.extract_strided_slice %226 {offsets = [0, 0], sizes = [8, 128], strides = [1, 1]} : vector<8x256xf32> to vector<8x128xf32>
    %228 = vector.extract_strided_slice %226 {offsets = [0, 128], sizes = [8, 128], strides = [1, 1]} : vector<8x256xf32> to vector<8x128xf32>
    %229 = arith.select %73, %227, %228 : vector<8x128xi1>, vector<8x128xf32>
    %230 = arith.index_cast %c5_i32 : i32 to index
    %c0_97 = arith.constant 0 : index
    %c0_98 = arith.constant 0 : index
    %231 = vector.load %arg16[%230, %c0_97, %c0_98] : memref<8x8x128xf32, #tpu.memory_space<vmem>>, vector<1x8x128xf32>
    %232 = vector.shape_cast %231 : vector<1x8x128xf32> to vector<8x128xf32>
    %233 = arith.addf %229, %232 : vector<8x128xf32>
    %234 = math.tanh %233 : vector<8x128xf32>
    %235 = vector.extract_strided_slice %234 {offsets = [0, 0], sizes = [8, 32], strides = [1, 1]} : vector<8x128xf32> to vector<8x32xf32>
    %cst_99 = arith.constant 5.000000e-01 : f32
    %236 = vector.broadcast %cst_99 : f32 to vector<8x32xf32>
    %237 = arith.mulf %236, %235 : vector<8x32xf32>
    %cst_100 = arith.constant 5.000000e-01 : f32
    %238 = vector.broadcast %cst_100 : f32 to vector<8x32xf32>
    %239 = arith.addf %237, %238 : vector<8x32xf32>
    %240 = vector.extract_strided_slice %234 {offsets = [0, 32], sizes = [8, 32], strides = [1, 1]} : vector<8x128xf32> to vector<8x32xf32>
    %cst_101 = arith.constant 5.000000e-01 : f32
    %241 = vector.broadcast %cst_101 : f32 to vector<8x32xf32>
    %242 = arith.mulf %241, %240 : vector<8x32xf32>
    %cst_102 = arith.constant 5.000000e-01 : f32
    %243 = vector.broadcast %cst_102 : f32 to vector<8x32xf32>
    %244 = arith.addf %242, %243 : vector<8x32xf32>
    %245 = vector.extract_strided_slice %234 {offsets = [0, 64], sizes = [8, 32], strides = [1, 1]} : vector<8x128xf32> to vector<8x32xf32>
    %246 = vector.extract_strided_slice %234 {offsets = [0, 96], sizes = [8, 32], strides = [1, 1]} : vector<8x128xf32> to vector<8x32xf32>
    %cst_103 = arith.constant 5.000000e-01 : f32
    %247 = vector.broadcast %cst_103 : f32 to vector<8x32xf32>
    %248 = arith.mulf %247, %246 : vector<8x32xf32>
    %cst_104 = arith.constant 5.000000e-01 : f32
    %249 = vector.broadcast %cst_104 : f32 to vector<8x32xf32>
    %250 = arith.addf %248, %249 : vector<8x32xf32>
    %251 = arith.mulf %244, %223 : vector<8x32xf32>
    %252 = arith.mulf %239, %245 : vector<8x32xf32>
    %253 = arith.addf %251, %252 : vector<8x32xf32>
    %254 = math.tanh %253 : vector<8x32xf32>
    %255 = arith.mulf %250, %254 : vector<8x32xf32>
    %c6_i32 = arith.constant 6 : i32
    %cst_105 = arith.constant dense<0.000000e+00> : vector<8x256xf32>
    %256 = tpu.matmul %255, %70, %cst_105 {dimension_numbers = #tpu.dot_dimension_numbers<[1], [0], [0], [1], [0, 0, 1, 1], [], []>} : vector<8x32xf32>, vector<32x256xf32>, vector<8x256xf32> -> vector<8x256xf32>
    %257 = vector.extract_strided_slice %256 {offsets = [0, 0], sizes = [8, 128], strides = [1, 1]} : vector<8x256xf32> to vector<8x128xf32>
    %258 = vector.extract_strided_slice %256 {offsets = [0, 128], sizes = [8, 128], strides = [1, 1]} : vector<8x256xf32> to vector<8x128xf32>
    %259 = arith.select %73, %257, %258 : vector<8x128xi1>, vector<8x128xf32>
    %260 = arith.index_cast %c6_i32 : i32 to index
    %c0_106 = arith.constant 0 : index
    %c0_107 = arith.constant 0 : index
    %261 = vector.load %arg16[%260, %c0_106, %c0_107] : memref<8x8x128xf32, #tpu.memory_space<vmem>>, vector<1x8x128xf32>
    %262 = vector.shape_cast %261 : vector<1x8x128xf32> to vector<8x128xf32>
    %263 = arith.addf %259, %262 : vector<8x128xf32>
    %264 = math.tanh %263 : vector<8x128xf32>
    %265 = vector.extract_strided_slice %264 {offsets = [0, 0], sizes = [8, 32], strides = [1, 1]} : vector<8x128xf32> to vector<8x32xf32>
    %cst_108 = arith.constant 5.000000e-01 : f32
    %266 = vector.broadcast %cst_108 : f32 to vector<8x32xf32>
    %267 = arith.mulf %266, %265 : vector<8x32xf32>
    %cst_109 = arith.constant 5.000000e-01 : f32
    %268 = vector.broadcast %cst_109 : f32 to vector<8x32xf32>
    %269 = arith.addf %267, %268 : vector<8x32xf32>
    %270 = vector.extract_strided_slice %264 {offsets = [0, 32], sizes = [8, 32], strides = [1, 1]} : vector<8x128xf32> to vector<8x32xf32>
    %cst_110 = arith.constant 5.000000e-01 : f32
    %271 = vector.broadcast %cst_110 : f32 to vector<8x32xf32>
    %272 = arith.mulf %271, %270 : vector<8x32xf32>
    %cst_111 = arith.constant 5.000000e-01 : f32
    %273 = vector.broadcast %cst_111 : f32 to vector<8x32xf32>
    %274 = arith.addf %272, %273 : vector<8x32xf32>
    %275 = vector.extract_strided_slice %264 {offsets = [0, 64], sizes = [8, 32], strides = [1, 1]} : vector<8x128xf32> to vector<8x32xf32>
    %276 = vector.extract_strided_slice %264 {offsets = [0, 96], sizes = [8, 32], strides = [1, 1]} : vector<8x128xf32> to vector<8x32xf32>
    %cst_112 = arith.constant 5.000000e-01 : f32
    %277 = vector.broadcast %cst_112 : f32 to vector<8x32xf32>
    %278 = arith.mulf %277, %276 : vector<8x32xf32>
    %cst_113 = arith.constant 5.000000e-01 : f32
    %279 = vector.broadcast %cst_113 : f32 to vector<8x32xf32>
    %280 = arith.addf %278, %279 : vector<8x32xf32>
    %281 = arith.mulf %274, %253 : vector<8x32xf32>
    %282 = arith.mulf %269, %275 : vector<8x32xf32>
    %283 = arith.addf %281, %282 : vector<8x32xf32>
    %284 = math.tanh %283 : vector<8x32xf32>
    %285 = arith.mulf %280, %284 : vector<8x32xf32>
    %c7_i32 = arith.constant 7 : i32
    %cst_114 = arith.constant dense<0.000000e+00> : vector<8x256xf32>
    %286 = tpu.matmul %285, %70, %cst_114 {dimension_numbers = #tpu.dot_dimension_numbers<[1], [0], [0], [1], [0, 0, 1, 1], [], []>} : vector<8x32xf32>, vector<32x256xf32>, vector<8x256xf32> -> vector<8x256xf32>
    %287 = vector.extract_strided_slice %286 {offsets = [0, 0], sizes = [8, 128], strides = [1, 1]} : vector<8x256xf32> to vector<8x128xf32>
    %288 = vector.extract_strided_slice %286 {offsets = [0, 128], sizes = [8, 128], strides = [1, 1]} : vector<8x256xf32> to vector<8x128xf32>
    %289 = arith.select %73, %287, %288 : vector<8x128xi1>, vector<8x128xf32>
    %290 = arith.index_cast %c7_i32 : i32 to index
    %c0_115 = arith.constant 0 : index
    %c0_116 = arith.constant 0 : index
    %291 = vector.load %arg16[%290, %c0_115, %c0_116] : memref<8x8x128xf32, #tpu.memory_space<vmem>>, vector<1x8x128xf32>
    %292 = vector.shape_cast %291 : vector<1x8x128xf32> to vector<8x128xf32>
    %293 = arith.addf %289, %292 : vector<8x128xf32>
    %294 = math.tanh %293 : vector<8x128xf32>
    %295 = vector.extract_strided_slice %294 {offsets = [0, 0], sizes = [8, 32], strides = [1, 1]} : vector<8x128xf32> to vector<8x32xf32>
    %cst_117 = arith.constant 5.000000e-01 : f32
    %296 = vector.broadcast %cst_117 : f32 to vector<8x32xf32>
    %297 = arith.mulf %296, %295 : vector<8x32xf32>
    %cst_118 = arith.constant 5.000000e-01 : f32
    %298 = vector.broadcast %cst_118 : f32 to vector<8x32xf32>
    %299 = arith.addf %297, %298 : vector<8x32xf32>
    %300 = vector.extract_strided_slice %294 {offsets = [0, 32], sizes = [8, 32], strides = [1, 1]} : vector<8x128xf32> to vector<8x32xf32>
    %cst_119 = arith.constant 5.000000e-01 : f32
    %301 = vector.broadcast %cst_119 : f32 to vector<8x32xf32>
    %302 = arith.mulf %301, %300 : vector<8x32xf32>
    %cst_120 = arith.constant 5.000000e-01 : f32
    %303 = vector.broadcast %cst_120 : f32 to vector<8x32xf32>
    %304 = arith.addf %302, %303 : vector<8x32xf32>
    %305 = vector.extract_strided_slice %294 {offsets = [0, 64], sizes = [8, 32], strides = [1, 1]} : vector<8x128xf32> to vector<8x32xf32>
    %306 = vector.extract_strided_slice %294 {offsets = [0, 96], sizes = [8, 32], strides = [1, 1]} : vector<8x128xf32> to vector<8x32xf32>
    %cst_121 = arith.constant 5.000000e-01 : f32
    %307 = vector.broadcast %cst_121 : f32 to vector<8x32xf32>
    %308 = arith.mulf %307, %306 : vector<8x32xf32>
    %cst_122 = arith.constant 5.000000e-01 : f32
    %309 = vector.broadcast %cst_122 : f32 to vector<8x32xf32>
    %310 = arith.addf %308, %309 : vector<8x32xf32>
    %311 = arith.mulf %304, %283 : vector<8x32xf32>
    %312 = arith.mulf %299, %305 : vector<8x32xf32>
    %313 = arith.addf %311, %312 : vector<8x32xf32>
    %314 = math.tanh %313 : vector<8x32xf32>
    %315 = arith.mulf %310, %314 : vector<8x32xf32>
    %c8_i32 = arith.constant 8 : i32
    %316 = vector.extract_strided_slice %315 {offsets = [0, 0], sizes = [4, 32], strides = [1, 1]} : vector<8x32xf32> to vector<4x32xf32>
    %317 = vector.extract_strided_slice %315 {offsets = [4, 0], sizes = [4, 32], strides = [1, 1]} : vector<8x32xf32> to vector<4x32xf32>
    %c0_123 = arith.constant 0 : index
    %c0_124 = arith.constant 0 : index
    %318 = vector.load %arg5[%c0_123, %c0_124] : memref<32x32xf32, #tpu.memory_space<vmem>>, vector<32x32xf32>
    %cst_125 = arith.constant dense<0.000000e+00> : vector<4x32xf32>
    %319 = tpu.matmul %316, %318, %cst_125 {dimension_numbers = #tpu.dot_dimension_numbers<[1], [0], [0], [1], [0, 0, 1, 1], [], []>} : vector<4x32xf32>, vector<32x32xf32>, vector<4x32xf32> -> vector<4x32xf32>
    %c0_126 = arith.constant 0 : index
    %c0_127 = arith.constant 0 : index
    %320 = vector.load %arg6[%c0_126, %c0_127] : memref<32x32xf32, #tpu.memory_space<vmem>>, vector<32x32xf32>
    %cst_128 = arith.constant dense<0.000000e+00> : vector<4x32xf32>
    %321 = tpu.matmul %317, %320, %cst_128 {dimension_numbers = #tpu.dot_dimension_numbers<[1], [0], [0], [1], [0, 0, 1, 1], [], []>} : vector<4x32xf32>, vector<32x32xf32>, vector<4x32xf32> -> vector<4x32xf32>
    %322 = arith.addf %319, %321 : vector<4x32xf32>
    %c0_129 = arith.constant 0 : index
    %c0_130 = arith.constant 0 : index
    %323 = vector.load %arg1[%c0_129, %c0_130] : memref<4x8xf32, #tpu.memory_space<vmem>>, vector<4x8xf32>
    %c0_131 = arith.constant 0 : index
    %c0_132 = arith.constant 0 : index
    %324 = vector.load %arg7[%c0_131, %c0_132] : memref<8x32xf32, #tpu.memory_space<vmem>>, vector<8x32xf32>
    %cst_133 = arith.constant dense<0.000000e+00> : vector<4x32xf32>
    %325 = tpu.matmul %323, %324, %cst_133 {dimension_numbers = #tpu.dot_dimension_numbers<[1], [0], [0], [1], [0, 0, 1, 1], [], []>} : vector<4x8xf32>, vector<8x32xf32>, vector<4x32xf32> -> vector<4x32xf32>
    %326 = arith.addf %322, %325 : vector<4x32xf32>
    %c0_134 = arith.constant 0 : index
    %c0_135 = arith.constant 0 : index
    %327 = vector.load %arg8[%c0_134, %c0_135] : memref<1x32xf32, #tpu.memory_space<vmem>>, vector<1x32xf32>
    %328 = vector.broadcast %327 : vector<1x32xf32> to vector<4x32xf32>
    %329 = arith.addf %326, %328 : vector<4x32xf32>
    %330 = math.tanh %329 : vector<4x32xf32>
    %c0_136 = arith.constant 0 : index
    %c0_137 = arith.constant 0 : index
    %331 = vector.load %arg9[%c0_136, %c0_137] : memref<32x32xf32, #tpu.memory_space<vmem>>, vector<32x32xf32>
    %cst_138 = arith.constant dense<0.000000e+00> : vector<4x32xf32>
    %332 = tpu.matmul %330, %331, %cst_138 {dimension_numbers = #tpu.dot_dimension_numbers<[1], [0], [0], [1], [0, 0, 1, 1], [], []>} : vector<4x32xf32>, vector<32x32xf32>, vector<4x32xf32> -> vector<4x32xf32>
    %c0_139 = arith.constant 0 : index
    %c0_140 = arith.constant 0 : index
    %333 = vector.load %arg10[%c0_139, %c0_140] : memref<1x32xf32, #tpu.memory_space<vmem>>, vector<1x32xf32>
    %334 = vector.broadcast %333 : vector<1x32xf32> to vector<4x32xf32>
    %335 = arith.addf %332, %334 : vector<4x32xf32>
    %336 = math.tanh %335 : vector<4x32xf32>
    %c0_141 = arith.constant 0 : index
    %c0_142 = arith.constant 0 : index
    %337 = vector.load %arg11[%c0_141, %c0_142] : memref<32x32xf32, #tpu.memory_space<vmem>>, vector<32x32xf32>
    %cst_143 = arith.constant dense<0.000000e+00> : vector<4x32xf32>
    %338 = tpu.matmul %336, %337, %cst_143 {dimension_numbers = #tpu.dot_dimension_numbers<[1], [0], [0], [1], [0, 0, 1, 1], [], []>} : vector<4x32xf32>, vector<32x32xf32>, vector<4x32xf32> -> vector<4x32xf32>
    %c0_144 = arith.constant 0 : index
    %c0_145 = arith.constant 0 : index
    %339 = vector.load %arg12[%c0_144, %c0_145] : memref<1x32xf32, #tpu.memory_space<vmem>>, vector<1x32xf32>
    %340 = vector.broadcast %339 : vector<1x32xf32> to vector<4x32xf32>
    %341 = arith.addf %338, %340 : vector<4x32xf32>
    %342 = math.tanh %341 : vector<4x32xf32>
    %c0_146 = arith.constant 0 : index
    %c0_147 = arith.constant 0 : index
    %343 = vector.load %arg13[%c0_146, %c0_147] : memref<32x4xf32, #tpu.memory_space<vmem>>, vector<32x4xf32>
    %cst_148 = arith.constant dense<0.000000e+00> : vector<4x4xf32>
    %344 = tpu.matmul %342, %343, %cst_148 {dimension_numbers = #tpu.dot_dimension_numbers<[1], [0], [0], [1], [0, 0, 1, 1], [], []>} : vector<4x32xf32>, vector<32x4xf32>, vector<4x4xf32> -> vector<4x4xf32>
    %c0_149 = arith.constant 0 : index
    %c0_150 = arith.constant 0 : index
    %345 = vector.load %arg14[%c0_149, %c0_150] : memref<1x4xf32, #tpu.memory_space<vmem>>, vector<1x4xf32>
    %346 = vector.broadcast %345 : vector<1x4xf32> to vector<4x4xf32>
    %347 = arith.addf %344, %346 : vector<4x4xf32>
    %c0_151 = arith.constant 0 : index
    %c0_152 = arith.constant 0 : index
    %348 = vector.load %arg15[%c0_151, %c0_152] : memref<4x4xf32, #tpu.memory_space<vmem>>, vector<4x4xf32>
    tpu.vector_store %arg15[%c0_151, %c0_152], %347 {strides = array<i32>} : memref<4x4xf32, #tpu.memory_space<vmem>>, vector<4x4xf32>,
    return
  }
}

</mosaic_0001>

<llo_original>
// kernel: lstm_attention_forward.1
$region0: #{lstm_attention_forward.1}
  #allocation0 [shape = 'u32[]', space=smem, size = 0x4, offset = 0x4, fixed_abs, tag = 'smem constant byte address 0x4 - core index']
  #allocation1 [shape = 'u32[144,128]{1,0:T(1,128)}', space=vmem, size = 0x12000, scoped, tag = 'internal scratch']
  #allocation2 [shape = 'f32[8,8,128]{2,1,0:T(8,128)}', space=vmem, size = 0x8000, scoped, tag = 'scratch operand']
  %s0 = inlined_call_operand.vmem [shape: f32[32,32], index: 0, kind: input, shape index: {}]
  %s1 = inlined_call_operand.vmem [shape: f32[4,8], index: 1, kind: input, shape index: {}]
  %s2 = inlined_call_operand.vmem [shape: f32[32,256], index: 2, kind: input, shape index: {}]
  %s3 = inlined_call_operand.vmem [shape: f32[32,256], index: 3, kind: input, shape index: {}]
  %s4 = inlined_call_operand.vmem [shape: f32[1,256], index: 4, kind: input, shape index: {}]
  %s5 = inlined_call_operand.vmem [shape: f32[32,32], index: 5, kind: input, shape index: {}]
  %s6 = inlined_call_operand.vmem [shape: f32[32,32], index: 6, kind: input, shape index: {}]
  %s7 = inlined_call_operand.vmem [shape: f32[8,32], index: 7, kind: input, shape index: {}]
  %s8 = inlined_call_operand.vmem [shape: f32[1,32], index: 8, kind: input, shape index: {}]
  %s9 = inlined_call_operand.vmem [shape: f32[32,32], index: 9, kind: input, shape index: {}]
  %s10 = inlined_call_operand.vmem [shape: f32[1,32], index: 10, kind: input, shape index: {}]
  %s11 = inlined_call_operand.vmem [shape: f32[32,32], index: 11, kind: input, shape index: {}]
  %s12 = inlined_call_operand.vmem [shape: f32[1,32], index: 12, kind: input, shape index: {}]
  %s13 = inlined_call_operand.vmem [shape: f32[32,4], index: 13, kind: input, shape index: {}]
  %s14 = inlined_call_operand.vmem [shape: f32[1,4], index: 14, kind: input, shape index: {}]
  %s15 = inlined_call_operand.hbm [shape: f32[4,4], index: 15, kind: output, shape index: {}]
  %s16 = sld [smem:[#allocation0]]
  $region70: #{lstm_attention_forward.1} parent=0
    _
  %s18 = ssub.s32 1, %s16
  %s19 = scalar_select 0, %s18, %s16
  $region1: #{lstm_attention_forward.1} parent=0
    #allocation3 [shape = 'u8[2048]{0}', space=vmem, size = 0x800, scoped, tag = 'output window, operand 0, single buffered']
    #allocation4 [shape = 's32[1]{0}', space=sflag, size = 0x4, scoped, tag = 'scoped memory for lstm_attention_forward.1']
    %20 = vsyncpa [#allocation4], 0
    // Predicated region
    $region2: #{lstm_attention_forward.1} parent=1 // pred_check
      _
    $region3: #{lstm_attention_forward.1} parent=1 // pred_check_branch
      %22 = sbr.rel (0) target = $region5
    $region4: #{lstm_attention_forward.1} parent=1 // pred_region
      _
    $region5: #{lstm_attention_forward.1} parent=1 // pred_fallthru
      _
    // Predicated region
    $region6: #{lstm_attention_forward.1} parent=1 // pred_check
      _
    $region7: #{lstm_attention_forward.1} parent=1 // pred_check_branch
      %24 = sbr.rel (0) target = $region9
    $region8: #{lstm_attention_forward.1} parent=1 // pred_region
      _
    $region9: #{lstm_attention_forward.1} parent=1 // pred_fallthru
      _
    // Predicated region
    $region10: #{lstm_attention_forward.1} parent=1 // pred_check
      _
    $region11: #{lstm_attention_forward.1} parent=1 // pred_check_branch
      %26 = sbr.rel (0) target = $region13
    $region12: #{lstm_attention_forward.1} parent=1 // pred_region
      _
    $region13: #{lstm_attention_forward.1} parent=1 // pred_fallthru
      _
    // Predicated region
    $region14: #{lstm_attention_forward.1} parent=1 // pred_check
      _
    $region15: #{lstm_attention_forward.1} parent=1 // pred_check_branch
      %28 = sbr.rel (0) target = $region17
    $region16: #{lstm_attention_forward.1} parent=1 // pred_region
      _
    $region17: #{lstm_attention_forward.1} parent=1 // pred_fallthru
      _
    // Predicated region
    $region18: #{lstm_attention_forward.1} parent=1 // pred_check
      _
    $region19: #{lstm_attention_forward.1} parent=1 // pred_check_branch
      %30 = sbr.rel (0) target = $region21
    $region20: #{lstm_attention_forward.1} parent=1 // pred_region
      _
    $region21: #{lstm_attention_forward.1} parent=1 // pred_fallthru
      _
    // Predicated region
    $region22: #{lstm_attention_forward.1} parent=1 // pred_check
      _
    $region23: #{lstm_attention_forward.1} parent=1 // pred_check_branch
      %32 = sbr.rel (0) target = $region25
    $region24: #{lstm_attention_forward.1} parent=1 // pred_region
      _
    $region25: #{lstm_attention_forward.1} parent=1 // pred_fallthru
      _
    // Predicated region
    $region26: #{lstm_attention_forward.1} parent=1 // pred_check
      _
    $region27: #{lstm_attention_forward.1} parent=1 // pred_check_branch
      %34 = sbr.rel (0) target = $region29
    $region28: #{lstm_attention_forward.1} parent=1 // pred_region
      _
    $region29: #{lstm_attention_forward.1} parent=1 // pred_fallthru
      _
    // Predicated region
    $region30: #{lstm_attention_forward.1} parent=1 // pred_check
      _
    $region31: #{lstm_attention_forward.1} parent=1 // pred_check_branch
      %36 = sbr.rel (0) target = $region33
    $region32: #{lstm_attention_forward.1} parent=1 // pred_region
      _
    $region33: #{lstm_attention_forward.1} parent=1 // pred_fallthru
      _
    // Predicated region
    $region34: #{lstm_attention_forward.1} parent=1 // pred_check
      _
    $region35: #{lstm_attention_forward.1} parent=1 // pred_check_branch
      %38 = sbr.rel (0) target = $region37
    $region36: #{lstm_attention_forward.1} parent=1 // pred_region
      _
    $region37: #{lstm_attention_forward.1} parent=1 // pred_fallthru
      _
    // Predicated region
    $region38: #{lstm_attention_forward.1} parent=1 // pred_check
      _
    $region39: #{lstm_attention_forward.1} parent=1 // pred_check_branch
      %40 = sbr.rel (0) target = $region41
    $region40: #{lstm_attention_forward.1} parent=1 // pred_region
      _
    $region41: #{lstm_attention_forward.1} parent=1 // pred_fallthru
      _
    // Predicated region
    $region42: #{lstm_attention_forward.1} parent=1 // pred_check
      _
    $region43: #{lstm_attention_forward.1} parent=1 // pred_check_branch
      %42 = sbr.rel (0) target = $region45
    $region44: #{lstm_attention_forward.1} parent=1 // pred_region
      _
    $region45: #{lstm_attention_forward.1} parent=1 // pred_fallthru
      _
    // Predicated region
    $region46: #{lstm_attention_forward.1} parent=1 // pred_check
      _
    $region47: #{lstm_attention_forward.1} parent=1 // pred_check_branch
      %44 = sbr.rel (0) target = $region49
    $region48: #{lstm_attention_forward.1} parent=1 // pred_region
      _
    $region49: #{lstm_attention_forward.1} parent=1 // pred_fallthru
      _
    // Predicated region
    $region50: #{lstm_attention_forward.1} parent=1 // pred_check
      _
    $region51: #{lstm_attention_forward.1} parent=1 // pred_check_branch
      %46 = sbr.rel (0) target = $region53
    $region52: #{lstm_attention_forward.1} parent=1 // pred_region
      _
    $region53: #{lstm_attention_forward.1} parent=1 // pred_fallthru
      _
    // Predicated region
    $region54: #{lstm_attention_forward.1} parent=1 // pred_check
      _
    $region55: #{lstm_attention_forward.1} parent=1 // pred_check_branch
      %48 = sbr.rel (0) target = $region57
    $region56: #{lstm_attention_forward.1} parent=1 // pred_region
      _
    $region57: #{lstm_attention_forward.1} parent=1 // pred_fallthru
      _
    // Predicated region
    $region58: #{lstm_attention_forward.1} parent=1 // pred_check
      _
    $region59: #{lstm_attention_forward.1} parent=1 // pred_check_branch
      %50 = sbr.rel (0) target = $region61
    $region60: #{lstm_attention_forward.1} parent=1 // pred_region
      _
    $region61: #{lstm_attention_forward.1} parent=1 // pred_fallthru
      _
    %v51 = vld [vmem:[%s0] sm:$0xff]
    %v52 = vld [vmem:[%s0 + $0x8] sm:$0xff]
    %v53 = vld [vmem:[%s0 + $0x10] sm:$0xff]
    %v54 = vld [vmem:[%s0 + $0x18] sm:$0xff]
    %v55 = vld [vmem:[%s2] sm:$0xff]
    %v56 = vld [vmem:[%s2 + $0x8] sm:$0xff]
    %v57 = vld [vmem:[%s2 + $0x10] sm:$0xff]
    %v58 = vld [vmem:[%s2 + $0x18] sm:$0xff]
    %v59 = vld [vmem:[%s2 + $0x20] sm:$0xff]
    %v60 = vld [vmem:[%s2 + $0x28] sm:$0xff]
    %v61 = vld [vmem:[%s2 + $0x30] sm:$0xff]
    %v62 = vld [vmem:[%s2 + $0x38] sm:$0xff]
    %v63 = vld [vmem:[%s4] sm:$0x3]
    %v65 = vlaneseq
    %v66 = vshrl.u32 %v65, 7
    %v67 = vsub.s32 0, %v66
    %v68 = vrot.slane %v63, %v67
    %v69 = vlaneseq
    %v70 = vshrl.u32 %v69, 7
    %v71 = vsub.s32 1, %v70
    %v72 = vrot.slane %v63, %v71
    %vm75 = vcmask 261120
    %v77 = vsel %vm75, %v51, 0
    %v80 = vsel %vm75, %v52, 0
    %v83 = vsel %vm75, %v53, 0
    %v86 = vsel %vm75, %v54, 0
    %88 = vmatprep.subr.mxu0 %v56
    %89 = vmatpush1.msra.mxu0 %v55
    %90 = vmatprep.subr.mxu0 %v58
    %91 = vmatpush1.msra.mxu0 %v57
    %92 = vmatprep.subr.mxu0 %v60
    %93 = vmatpush1.msra.mxu0 %v59
    %94 = vmatprep.subr.mxu0 %v62
    %95 = vmatpush1.msra.mxu0 %v61
    %96 = vmatprep.subr.mxu0 0.0
    %97 = vmatpush1.msra.mxu0 0.0
    %98 = vmatprep.subr.mxu0 0.0
    %99 = vmatpush1.msra.mxu0 0.0
    %100 = vmatprep.subr.mxu0 0.0
    %101 = vmatpush1.msra.mxu0 0.0
    %102 = vmatprep.subr.mxu0 0.0
    %103 = vmatpush1.msra.mxu0 0.0
    %104 = vmatprep.subr.mxu0 0.0
    %105 = vmatpush1.msra.mxu0 0.0
    %106 = vmatprep.subr.mxu0 0.0
    %107 = vmatpush1.msra.mxu0 0.0
    %108 = vmatprep.subr.mxu0 0.0
    %109 = vmatpush1.msra.mxu0 0.0
    %110 = vmatprep.subr.mxu0 0.0
    %111 = vmatpush1.msra.mxu0 0.0
    %112 = vmatprep.subr.mxu0 0.0
    %113 = vmatpush1.msra.mxu0 0.0
    %114 = vmatprep.subr.mxu0 0.0
    %115 = vmatpush1.msra.mxu0 0.0
    %116 = vmatprep.subr.mxu0 0.0
    %117 = vmatpush1.msra.mxu0 0.0
    %118 = vmatprep.subr.mxu0 0.0
    %119 = vmatpush1.msra.mxu0 0.0
    %120 = vmatprep.subr.mxu0 0.0
    %121 = vmatpush1.msra.mxu0 0.0
    %122 = vmatprep.subr.mxu0 0.0
    %123 = vmatpush1.msra.mxu0 0.0
    %124 = vmatprep.subr.mxu0 0.0
    %125 = vmatpush1.msra.mxu0 0.0
    %126 = vmatprep.subr.mxu0 0.0
    %127 = vmatpush1.msra.mxu0 0.0
    %128 = vmatprep.subr.mxu0 0.0
    %129 = vmatpush1.msra.mxu0 0.0
    %130 = vmatprep.subr.mxu0 0.0
    %131 = vmatpush1.msra.mxu0 0.0
    %132 = vmatprep.subr.mxu0 0.0
    %133 = vmatpush1.msra.mxu0 0.0
    %134 = vmatprep.subr.mxu0 0.0
    %135 = vmatpush1.msra.mxu0 0.0
    %136 = vmatprep.subr.mxu0 0.0
    %137 = vmatpush1.msra.mxu0 0.0
    %138 = vmatprep.subr.mxu0 0.0
    %139 = vmatpush1.msra.mxu0 0.0
    %140 = vmatprep.subr.mxu0 0.0
    %141 = vmatpush1.msra.mxu0 0.0
    %142 = vmatprep.subr.mxu0 0.0
    %143 = vmatpush1.msra.mxu0 0.0
    %144 = vmatprep.subr.mxu0 0.0
    %145 = vmatpush1.msra.mxu0 0.0
    %146 = vmatprep.subr.mxu0 0.0
    %147 = vmatpush1.msra.mxu0 0.0
    %148 = vmatprep.subr.mxu0 0.0
    %149 = vmatpush1.msra.mxu0 0.0
    %150 = vmatprep.subr.mxu0 0.0
    %151 = vmatpush1.msra.mxu0 0.0
    %152 = vmatprep.mubr.f32.mxu0 0.0
    %153 = vmatmul.mubr.f32.gmra.mrb[0].mxu0 %v77
    %v154 = vpop.f32.mrb[0].mxu0
    %v155 = vadd.f32 %v68, %v154
    %v156 = vpop.f32.mrb[0].mxu0
    %v157 = vadd.f32 %v72, %v156
    %158 = vmatprep.mubr.f32.mxu0 0.0
    %159 = vmatmul.mubr.f32.gmra.mrb[0].mxu0 %v80
    %v160 = vpop.f32.mrb[0].mxu0
    %v161 = vadd.f32 %v68, %v160
    %v162 = vpop.f32.mrb[0].mxu0
    %v163 = vadd.f32 %v72, %v162
    %164 = vmatprep.mubr.f32.mxu0 0.0
    %165 = vmatmul.mubr.f32.gmra.mrb[0].mxu0 %v83
    %v166 = vpop.f32.mrb[0].mxu0
    %v167 = vadd.f32 %v68, %v166
    %v168 = vpop.f32.mrb[0].mxu0
    %v169 = vadd.f32 %v72, %v168
    %170 = vmatprep.mubr.f32.mxu0 0.0
    %171 = vmatmul.mubr.f32.gmra.mrb[0].mxu0 %v86
    %v172 = vpop.f32.mrb[0].mxu0
    %v173 = vadd.f32 %v68, %v172
    %v174 = vpop.f32.mrb[0].mxu0
    %v175 = vadd.f32 %v72, %v174
    %176 = vdwg.mxu0
    %177 = vst [vmem:[#allocation2] sm:$0xf] %v155
    %178 = vst [vmem:[#allocation2] sm:$0xf0] %v175
    %s179 = scalar_lea.vmem [#allocation2], 8
    %180 = vst [vmem:[%s179 - $0x4] sm:$0xf0] %v155
    %181 = vst [vmem:[%s179 + $0x4] sm:$0xf] %v175
    %s182 = scalar_lea.vmem [#allocation2], 16
    %183 = vst [vmem:[%s182] sm:$0xf] %v161
    %184 = vst [vmem:[%s182] sm:$0xf0] %v169
    %s185 = scalar_lea.vmem [#allocation2], 24
    %186 = vst [vmem:[%s185 - $0x4] sm:$0xf0] %v161
    %187 = vst [vmem:[%s185 + $0x4] sm:$0xf] %v169
    %s188 = scalar_lea.vmem [#allocation2], 32
    %189 = vst [vmem:[%s188] sm:$0xf] %v167
    %190 = vst [vmem:[%s188] sm:$0xf0] %v163
    %s191 = scalar_lea.vmem [#allocation2], 40
    %192 = vst [vmem:[%s191 - $0x4] sm:$0xf0] %v167
    %193 = vst [vmem:[%s191 + $0x4] sm:$0xf] %v163
    %s194 = scalar_lea.vmem [#allocation2], 48
    %195 = vst [vmem:[%s194] sm:$0xf] %v173
    %196 = vst [vmem:[%s194] sm:$0xf0] %v157
    %s197 = scalar_lea.vmem [#allocation2], 56
    %198 = vst [vmem:[%s197 - $0x4] sm:$0xf0] %v173
    %199 = vst [vmem:[%s197 + $0x4] sm:$0xf] %v157
    %v200 = vld [vmem:[%s3] sm:$0xff]
    %v201 = vld [vmem:[%s3 + $0x8] sm:$0xff]
    %v202 = vld [vmem:[%s3 + $0x10] sm:$0xff]
    %v203 = vld [vmem:[%s3 + $0x18] sm:$0xff]
    %v204 = vld [vmem:[%s3 + $0x20] sm:$0xff]
    %v205 = vld [vmem:[%s3 + $0x28] sm:$0xff]
    %v206 = vld [vmem:[%s3 + $0x30] sm:$0xff]
    %v207 = vld [vmem:[%s3 + $0x38] sm:$0xff]
    %v208 = vlaneseq
    %v209 = vshrl.u32 %v208, 7
    %vm210 = vcmp.lt.s32.totalorder %v209, 4
    %v212 = vsel %vm75, 0.0, 0
    %214 = vmatprep.subr.mxu0 %v201
    %215 = vmatpush1.msra.mxu0 %v200
    %216 = vmatprep.subr.mxu0 %v203
    %217 = vmatpush1.msra.mxu0 %v202
    %218 = vmatprep.subr.mxu0 %v205
    %219 = vmatpush1.msra.mxu0 %v204
    %220 = vmatprep.subr.mxu0 %v207
    %221 = vmatpush1.msra.mxu0 %v206
    %222 = vmatprep.subr.mxu0 0.0
    %223 = vmatpush1.msra.mxu0 0.0
    %224 = vmatprep.subr.mxu0 0.0
    %225 = vmatpush1.msra.mxu0 0.0
    %226 = vmatprep.subr.mxu0 0.0
    %227 = vmatpush1.msra.mxu0 0.0
    %228 = vmatprep.subr.mxu0 0.0
    %229 = vmatpush1.msra.mxu0 0.0
    %230 = vmatprep.subr.mxu0 0.0
    %231 = vmatpush1.msra.mxu0 0.0
    %232 = vmatprep.subr.mxu0 0.0
    %233 = vmatpush1.msra.mxu0 0.0
    %234 = vmatprep.subr.mxu0 0.0
    %235 = vmatpush1.msra.mxu0 0.0
    %236 = vmatprep.subr.mxu0 0.0
    %237 = vmatpush1.msra.mxu0 0.0
    %238 = vmatprep.subr.mxu0 0.0
    %239 = vmatpush1.msra.mxu0 0.0
    %240 = vmatprep.subr.mxu0 0.0
    %241 = vmatpush1.msra.mxu0 0.0
    %242 = vmatprep.subr.mxu0 0.0
    %243 = vmatpush1.msra.mxu0 0.0
    %244 = vmatprep.subr.mxu0 0.0
    %245 = vmatpush1.msra.mxu0 0.0
    %246 = vmatprep.subr.mxu0 0.0
    %247 = vmatpush1.msra.mxu0 0.0
    %248 = vmatprep.subr.mxu0 0.0
    %249 = vmatpush1.msra.mxu0 0.0
    %250 = vmatprep.subr.mxu0 0.0
    %251 = vmatpush1.msra.mxu0 0.0
    %252 = vmatprep.subr.mxu0 0.0
    %253 = vmatpush1.msra.mxu0 0.0
    %254 = vmatprep.subr.mxu0 0.0
    %255 = vmatpush1.msra.mxu0 0.0
    %256 = vmatprep.subr.mxu0 0.0
    %257 = vmatpush1.msra.mxu0 0.0
    %258 = vmatprep.subr.mxu0 0.0
    %259 = vmatpush1.msra.mxu0 0.0
    %260 = vmatprep.subr.mxu0 0.0
    %261 = vmatpush1.msra.mxu0 0.0
    %262 = vmatprep.subr.mxu0 0.0
    %263 = vmatpush1.msra.mxu0 0.0
    %264 = vmatprep.subr.mxu0 0.0
    %265 = vmatpush1.msra.mxu0 0.0
    %266 = vmatprep.subr.mxu0 0.0
    %267 = vmatpush1.msra.mxu0 0.0
    %268 = vmatprep.subr.mxu0 0.0
    %269 = vmatpush1.msra.mxu0 0.0
    %270 = vmatprep.subr.mxu0 0.0
    %271 = vmatpush1.msra.mxu0 0.0
    %272 = vmatprep.subr.mxu0 0.0
    %273 = vmatpush1.msra.mxu0 0.0
    %274 = vmatprep.subr.mxu0 0.0
    %275 = vmatpush1.msra.mxu0 0.0
    %276 = vmatprep.subr.mxu0 0.0
    %277 = vmatpush1.msra.mxu0 0.0
    %278 = vmatprep.mubr.f32.mxu0 0.0
    %279 = vmatmul.mubr.f32.gmra.mrb[0].mxu0 %v212
    %v280 = vpop.f32.mrb[0].mxu0
    %v281 = vadd.f32 0.0, %v280
    %v282 = vpop.f32.mrb[0].mxu0
    %v283 = vadd.f32 0.0, %v282
    %284 = vdwg.mxu0
    %v285 = vsel %vm210, %v281, %v283
    %v286 = vld [vmem:[#allocation2] sm:$0xff]
    %v287 = vadd.f32 %v285, %v286
    %v288 = vtanh.pop %v287
    %v289 = vmul.f32 %v288, 0.5
    %v290 = vadd.f32 %v289, 0.5
    %v291 = vmul.f32 %v290, 0.0
    %293 = vrot.lane.b32.xlu0 %v288, 64
    %v294 = vpop.permute.xlu0 %293
    %v296 = vmul.f32 %v290, %v294
    %298 = vrot.lane.b32.xlu0 %v296, 32
    %v299 = vpop.permute.xlu0 %298
    %v301 = vadd.f32 %v291, %v299
    %v302 = vtanh.pop %v301
    %304 = vrot.lane.b32.xlu0 %v302, 64
    %v305 = vpop.permute.xlu0 %304
    %v307 = vmul.f32 %v290, %v305
    %309 = vrot.lane.b32.xlu0 %v307, 32
    %v310 = vpop.permute.xlu0 %309
    %v311 = vsel %vm75, %v310, 0
    %313 = vmatprep.subr.mxu0 %v201
    %314 = vmatpush1.msra.mxu0 %v200
    %315 = vmatprep.subr.mxu0 %v203
    %316 = vmatpush1.msra.mxu0 %v202
    %317 = vmatprep.subr.mxu0 %v205
    %318 = vmatpush1.msra.mxu0 %v204
    %319 = vmatprep.subr.mxu0 %v207
    %320 = vmatpush1.msra.mxu0 %v206
    %321 = vmatprep.subr.mxu0 0.0
    %322 = vmatpush1.msra.mxu0 0.0
    %323 = vmatprep.subr.mxu0 0.0
    %324 = vmatpush1.msra.mxu0 0.0
    %325 = vmatprep.subr.mxu0 0.0
    %326 = vmatpush1.msra.mxu0 0.0
    %327 = vmatprep.subr.mxu0 0.0
    %328 = vmatpush1.msra.mxu0 0.0
    %329 = vmatprep.subr.mxu0 0.0
    %330 = vmatpush1.msra.mxu0 0.0
    %331 = vmatprep.subr.mxu0 0.0
    %332 = vmatpush1.msra.mxu0 0.0
    %333 = vmatprep.subr.mxu0 0.0
    %334 = vmatpush1.msra.mxu0 0.0
    %335 = vmatprep.subr.mxu0 0.0
    %336 = vmatpush1.msra.mxu0 0.0
    %337 = vmatprep.subr.mxu0 0.0
    %338 = vmatpush1.msra.mxu0 0.0
    %339 = vmatprep.subr.mxu0 0.0
    %340 = vmatpush1.msra.mxu0 0.0
    %341 = vmatprep.subr.mxu0 0.0
    %342 = vmatpush1.msra.mxu0 0.0
    %343 = vmatprep.subr.mxu0 0.0
    %344 = vmatpush1.msra.mxu0 0.0
    %345 = vmatprep.subr.mxu0 0.0
    %346 = vmatpush1.msra.mxu0 0.0
    %347 = vmatprep.subr.mxu0 0.0
    %348 = vmatpush1.msra.mxu0 0.0
    %349 = vmatprep.subr.mxu0 0.0
    %350 = vmatpush1.msra.mxu0 0.0
    %351 = vmatprep.subr.mxu0 0.0
    %352 = vmatpush1.msra.mxu0 0.0
    %353 = vmatprep.subr.mxu0 0.0
    %354 = vmatpush1.msra.mxu0 0.0
    %355 = vmatprep.subr.mxu0 0.0
    %356 = vmatpush1.msra.mxu0 0.0
    %357 = vmatprep.subr.mxu0 0.0
    %358 = vmatpush1.msra.mxu0 0.0
    %359 = vmatprep.subr.mxu0 0.0
    %360 = vmatpush1.msra.mxu0 0.0
    %361 = vmatprep.subr.mxu0 0.0
    %362 = vmatpush1.msra.mxu0 0.0
    %363 = vmatprep.subr.mxu0 0.0
    %364 = vmatpush1.msra.mxu0 0.0
    %365 = vmatprep.subr.mxu0 0.0
    %366 = vmatpush1.msra.mxu0 0.0
    %367 = vmatprep.subr.mxu0 0.0
    %368 = vmatpush1.msra.mxu0 0.0
    %369 = vmatprep.subr.mxu0 0.0
    %370 = vmatpush1.msra.mxu0 0.0
    %371 = vmatprep.subr.mxu0 0.0
    %372 = vmatpush1.msra.mxu0 0.0
    %373 = vmatprep.subr.mxu0 0.0
    %374 = vmatpush1.msra.mxu0 0.0
    %375 = vmatprep.subr.mxu0 0.0
    %376 = vmatpush1.msra.mxu0 0.0
    %377 = vmatprep.mubr.f32.mxu0 0.0
    %378 = vmatmul.mubr.f32.gmra.mrb[0].mxu0 %v311
    %v379 = vpop.f32.mrb[0].mxu0
    %v380 = vadd.f32 0.0, %v379
    %v381 = vpop.f32.mrb[0].mxu0
    %v382 = vadd.f32 0.0, %v381
    %383 = vdwg.mxu0
    %v384 = vsel %vm210, %v380, %v382
    %v385 = vld [vmem:[%s179] sm:$0xff]
    %v386 = vadd.f32 %v384, %v385
    %v387 = vtanh.pop %v386
    %v388 = vmul.f32 %v387, 0.5
    %v389 = vadd.f32 %v388, 0.5
    %v390 = vmul.f32 %v389, %v301
    %392 = vrot.lane.b32.xlu0 %v387, 64
    %v393 = vpop.permute.xlu0 %392
    %v395 = vmul.f32 %v389, %v393
    %397 = vrot.lane.b32.xlu0 %v395, 32
    %v398 = vpop.permute.xlu0 %397
    %v400 = vadd.f32 %v390, %v398
    %v401 = vtanh.pop %v400
    %403 = vrot.lane.b32.xlu0 %v401, 64
    %v404 = vpop.permute.xlu0 %403
    %v406 = vmul.f32 %v389, %v404
    %408 = vrot.lane.b32.xlu0 %v406, 32
    %v409 = vpop.permute.xlu0 %408
    %v410 = vsel %vm75, %v409, 0
    %412 = vmatprep.subr.mxu0 %v201
    %413 = vmatpush1.msra.mxu0 %v200
    %414 = vmatprep.subr.mxu0 %v203
    %415 = vmatpush1.msra.mxu0 %v202
    %416 = vmatprep.subr.mxu0 %v205
    %417 = vmatpush1.msra.mxu0 %v204
    %418 = vmatprep.subr.mxu0 %v207
    %419 = vmatpush1.msra.mxu0 %v206
    %420 = vmatprep.subr.mxu0 0.0
    %421 = vmatpush1.msra.mxu0 0.0
    %422 = vmatprep.subr.mxu0 0.0
    %423 = vmatpush1.msra.mxu0 0.0
    %424 = vmatprep.subr.mxu0 0.0
    %425 = vmatpush1.msra.mxu0 0.0
    %426 = vmatprep.subr.mxu0 0.0
    %427 = vmatpush1.msra.mxu0 0.0
    %428 = vmatprep.subr.mxu0 0.0
    %429 = vmatpush1.msra.mxu0 0.0
    %430 = vmatprep.subr.mxu0 0.0
    %431 = vmatpush1.msra.mxu0 0.0
    %432 = vmatprep.subr.mxu0 0.0
    %433 = vmatpush1.msra.mxu0 0.0
    %434 = vmatprep.subr.mxu0 0.0
    %435 = vmatpush1.msra.mxu0 0.0
    %436 = vmatprep.subr.mxu0 0.0
    %437 = vmatpush1.msra.mxu0 0.0
    %438 = vmatprep.subr.mxu0 0.0
    %439 = vmatpush1.msra.mxu0 0.0
    %440 = vmatprep.subr.mxu0 0.0
    %441 = vmatpush1.msra.mxu0 0.0
    %442 = vmatprep.subr.mxu0 0.0
    %443 = vmatpush1.msra.mxu0 0.0
    %444 = vmatprep.subr.mxu0 0.0
    %445 = vmatpush1.msra.mxu0 0.0
    %446 = vmatprep.subr.mxu0 0.0
    %447 = vmatpush1.msra.mxu0 0.0
    %448 = vmatprep.subr.mxu0 0.0
    %449 = vmatpush1.msra.mxu0 0.0
    %450 = vmatprep.subr.mxu0 0.0
    %451 = vmatpush1.msra.mxu0 0.0
    %452 = vmatprep.subr.mxu0 0.0
    %453 = vmatpush1.msra.mxu0 0.0
    %454 = vmatprep.subr.mxu0 0.0
    %455 = vmatpush1.msra.mxu0 0.0
    %456 = vmatprep.subr.mxu0 0.0
    %457 = vmatpush1.msra.mxu0 0.0
    %458 = vmatprep.subr.mxu0 0.0
    %459 = vmatpush1.msra.mxu0 0.0
    %460 = vmatprep.subr.mxu0 0.0
    %461 = vmatpush1.msra.mxu0 0.0
    %462 = vmatprep.subr.mxu0 0.0
    %463 = vmatpush1.msra.mxu0 0.0
    %464 = vmatprep.subr.mxu0 0.0
    %465 = vmatpush1.msra.mxu0 0.0
    %466 = vmatprep.subr.mxu0 0.0
    %467 = vmatpush1.msra.mxu0 0.0
    %468 = vmatprep.subr.mxu0 0.0
    %469 = vmatpush1.msra.mxu0 0.0
    %470 = vmatprep.subr.mxu0 0.0
    %471 = vmatpush1.msra.mxu0 0.0
    %472 = vmatprep.subr.mxu0 0.0
    %473 = vmatpush1.msra.mxu0 0.0
    %474 = vmatprep.subr.mxu0 0.0
    %475 = vmatpush1.msra.mxu0 0.0
    %476 = vmatprep.mubr.f32.mxu0 0.0
    %477 = vmatmul.mubr.f32.gmra.mrb[0].mxu0 %v410
    %v478 = vpop.f32.mrb[0].mxu0
    %v479 = vadd.f32 0.0, %v478
    %v480 = vpop.f32.mrb[0].mxu0
    %v481 = vadd.f32 0.0, %v480
    %482 = vdwg.mxu0
    %v483 = vsel %vm210, %v479, %v481
    %v484 = vld [vmem:[%s182] sm:$0xff]
    %v485 = vadd.f32 %v483, %v484
    %v486 = vtanh.pop %v485
    %v487 = vmul.f32 %v486, 0.5
    %v488 = vadd.f32 %v487, 0.5
    %v489 = vmul.f32 %v488, %v400
    %491 = vrot.lane.b32.xlu0 %v486, 64
    %v492 = vpop.permute.xlu0 %491
    %v494 = vmul.f32 %v488, %v492
    %496 = vrot.lane.b32.xlu0 %v494, 32
    %v497 = vpop.permute.xlu0 %496
    %v499 = vadd.f32 %v489, %v497
    %v500 = vtanh.pop %v499
    %502 = vrot.lane.b32.xlu0 %v500, 64
    %v503 = vpop.permute.xlu0 %502
    %v505 = vmul.f32 %v488, %v503
    %507 = vrot.lane.b32.xlu0 %v505, 32
    %v508 = vpop.permute.xlu0 %507
    %v509 = vsel %vm75, %v508, 0
    %511 = vmatprep.subr.mxu0 %v201
    %512 = vmatpush1.msra.mxu0 %v200
    %513 = vmatprep.subr.mxu0 %v203
    %514 = vmatpush1.msra.mxu0 %v202
    %515 = vmatprep.subr.mxu0 %v205
    %516 = vmatpush1.msra.mxu0 %v204
    %517 = vmatprep.subr.mxu0 %v207
    %518 = vmatpush1.msra.mxu0 %v206
    %519 = vmatprep.subr.mxu0 0.0
    %520 = vmatpush1.msra.mxu0 0.0
    %521 = vmatprep.subr.mxu0 0.0
    %522 = vmatpush1.msra.mxu0 0.0
    %523 = vmatprep.subr.mxu0 0.0
    %524 = vmatpush1.msra.mxu0 0.0
    %525 = vmatprep.subr.mxu0 0.0
    %526 = vmatpush1.msra.mxu0 0.0
    %527 = vmatprep.subr.mxu0 0.0
    %528 = vmatpush1.msra.mxu0 0.0
    %529 = vmatprep.subr.mxu0 0.0
    %530 = vmatpush1.msra.mxu0 0.0
    %531 = vmatprep.subr.mxu0 0.0
    %532 = vmatpush1.msra.mxu0 0.0
    %533 = vmatprep.subr.mxu0 0.0
    %534 = vmatpush1.msra.mxu0 0.0
    %535 = vmatprep.subr.mxu0 0.0
    %536 = vmatpush1.msra.mxu0 0.0
    %537 = vmatprep.subr.mxu0 0.0
    %538 = vmatpush1.msra.mxu0 0.0
    %539 = vmatprep.subr.mxu0 0.0
    %540 = vmatpush1.msra.mxu0 0.0
    %541 = vmatprep.subr.mxu0 0.0
    %542 = vmatpush1.msra.mxu0 0.0
    %543 = vmatprep.subr.mxu0 0.0
    %544 = vmatpush1.msra.mxu0 0.0
    %545 = vmatprep.subr.mxu0 0.0
    %546 = vmatpush1.msra.mxu0 0.0
    %547 = vmatprep.subr.mxu0 0.0
    %548 = vmatpush1.msra.mxu0 0.0
    %549 = vmatprep.subr.mxu0 0.0
    %550 = vmatpush1.msra.mxu0 0.0
    %551 = vmatprep.subr.mxu0 0.0
    %552 = vmatpush1.msra.mxu0 0.0
    %553 = vmatprep.subr.mxu0 0.0
    %554 = vmatpush1.msra.mxu0 0.0
    %555 = vmatprep.subr.mxu0 0.0
    %556 = vmatpush1.msra.mxu0 0.0
    %557 = vmatprep.subr.mxu0 0.0
    %558 = vmatpush1.msra.mxu0 0.0
    %559 = vmatprep.subr.mxu0 0.0
    %560 = vmatpush1.msra.mxu0 0.0
    %561 = vmatprep.subr.mxu0 0.0
    %562 = vmatpush1.msra.mxu0 0.0
    %563 = vmatprep.subr.mxu0 0.0
    %564 = vmatpush1.msra.mxu0 0.0
    %565 = vmatprep.subr.mxu0 0.0
    %566 = vmatpush1.msra.mxu0 0.0
    %567 = vmatprep.subr.mxu0 0.0
    %568 = vmatpush1.msra.mxu0 0.0
    %569 = vmatprep.subr.mxu0 0.0
    %570 = vmatpush1.msra.mxu0 0.0
    %571 = vmatprep.subr.mxu0 0.0
    %572 = vmatpush1.msra.mxu0 0.0
    %573 = vmatprep.subr.mxu0 0.0
    %574 = vmatpush1.msra.mxu0 0.0
    %575 = vmatprep.mubr.f32.mxu0 0.0
    %576 = vmatmul.mubr.f32.gmra.mrb[0].mxu0 %v509
    %v577 = vpop.f32.mrb[0].mxu0
    %v578 = vadd.f32 0.0, %v577
    %v579 = vpop.f32.mrb[0].mxu0
    %v580 = vadd.f32 0.0, %v579
    %581 = vdwg.mxu0
    %v582 = vsel %vm210, %v578, %v580
    %v583 = vld [vmem:[%s185] sm:$0xff]
    %v584 = vadd.f32 %v582, %v583
    %v585 = vtanh.pop %v584
    %v586 = vmul.f32 %v585, 0.5
    %v587 = vadd.f32 %v586, 0.5
    %v588 = vmul.f32 %v587, %v499
    %590 = vrot.lane.b32.xlu0 %v585, 64
    %v591 = vpop.permute.xlu0 %590
    %v593 = vmul.f32 %v587, %v591
    %595 = vrot.lane.b32.xlu0 %v593, 32
    %v596 = vpop.permute.xlu0 %595
    %v598 = vadd.f32 %v588, %v596
    %v599 = vtanh.pop %v598
    %601 = vrot.lane.b32.xlu0 %v599, 64
    %v602 = vpop.permute.xlu0 %601
    %v604 = vmul.f32 %v587, %v602
    %606 = vrot.lane.b32.xlu0 %v604, 32
    %v607 = vpop.permute.xlu0 %606
    %v608 = vsel %vm75, %v607, 0
    %610 = vmatprep.subr.mxu0 %v201
    %611 = vmatpush1.msra.mxu0 %v200
    %612 = vmatprep.subr.mxu0 %v203
    %613 = vmatpush1.msra.mxu0 %v202
    %614 = vmatprep.subr.mxu0 %v205
    %615 = vmatpush1.msra.mxu0 %v204
    %616 = vmatprep.subr.mxu0 %v207
    %617 = vmatpush1.msra.mxu0 %v206
    %618 = vmatprep.subr.mxu0 0.0
    %619 = vmatpush1.msra.mxu0 0.0
    %620 = vmatprep.subr.mxu0 0.0
    %621 = vmatpush1.msra.mxu0 0.0
    %622 = vmatprep.subr.mxu0 0.0
    %623 = vmatpush1.msra.mxu0 0.0
    %624 = vmatprep.subr.mxu0 0.0
    %625 = vmatpush1.msra.mxu0 0.0
    %626 = vmatprep.subr.mxu0 0.0
    %627 = vmatpush1.msra.mxu0 0.0
    %628 = vmatprep.subr.mxu0 0.0
    %629 = vmatpush1.msra.mxu0 0.0
    %630 = vmatprep.subr.mxu0 0.0
    %631 = vmatpush1.msra.mxu0 0.0
    %632 = vmatprep.subr.mxu0 0.0
    %633 = vmatpush1.msra.mxu0 0.0
    %634 = vmatprep.subr.mxu0 0.0
    %635 = vmatpush1.msra.mxu0 0.0
    %636 = vmatprep.subr.mxu0 0.0
    %637 = vmatpush1.msra.mxu0 0.0
    %638 = vmatprep.subr.mxu0 0.0
    %639 = vmatpush1.msra.mxu0 0.0
    %640 = vmatprep.subr.mxu0 0.0
    %641 = vmatpush1.msra.mxu0 0.0
    %642 = vmatprep.subr.mxu0 0.0
    %643 = vmatpush1.msra.mxu0 0.0
    %644 = vmatprep.subr.mxu0 0.0
    %645 = vmatpush1.msra.mxu0 0.0
    %646 = vmatprep.subr.mxu0 0.0
    %647 = vmatpush1.msra.mxu0 0.0
    %648 = vmatprep.subr.mxu0 0.0
    %649 = vmatpush1.msra.mxu0 0.0
    %650 = vmatprep.subr.mxu0 0.0
    %651 = vmatpush1.msra.mxu0 0.0
    %652 = vmatprep.subr.mxu0 0.0
    %653 = vmatpush1.msra.mxu0 0.0
    %654 = vmatprep.subr.mxu0 0.0
    %655 = vmatpush1.msra.mxu0 0.0
    %656 = vmatprep.subr.mxu0 0.0
    %657 = vmatpush1.msra.mxu0 0.0
    %658 = vmatprep.subr.mxu0 0.0
    %659 = vmatpush1.msra.mxu0 0.0
    %660 = vmatprep.subr.mxu0 0.0
    %661 = vmatpush1.msra.mxu0 0.0
    %662 = vmatprep.subr.mxu0 0.0
    %663 = vmatpush1.msra.mxu0 0.0
    %664 = vmatprep.subr.mxu0 0.0
    %665 = vmatpush1.msra.mxu0 0.0
    %666 = vmatprep.subr.mxu0 0.0
    %667 = vmatpush1.msra.mxu0 0.0
    %668 = vmatprep.subr.mxu0 0.0
    %669 = vmatpush1.msra.mxu0 0.0
    %670 = vmatprep.subr.mxu0 0.0
    %671 = vmatpush1.msra.mxu0 0.0
    %672 = vmatprep.subr.mxu0 0.0
    %673 = vmatpush1.msra.mxu0 0.0
    %674 = vmatprep.mubr.f32.mxu0 0.0
    %675 = vmatmul.mubr.f32.gmra.mrb[0].mxu0 %v608
    %v676 = vpop.f32.mrb[0].mxu0
    %v677 = vadd.f32 0.0, %v676
    %v678 = vpop.f32.mrb[0].mxu0
    %v679 = vadd.f32 0.0, %v678
    %680 = vdwg.mxu0
    %v681 = vsel %vm210, %v677, %v679
    %v682 = vld [vmem:[%s188] sm:$0xff]
    %v683 = vadd.f32 %v681, %v682
    %v684 = vtanh.pop %v683
    %v685 = vmul.f32 %v684, 0.5
    %v686 = vadd.f32 %v685, 0.5
    %v687 = vmul.f32 %v686, %v598
    %689 = vrot.lane.b32.xlu0 %v684, 64
    %v690 = vpop.permute.xlu0 %689
    %v692 = vmul.f32 %v686, %v690
    %694 = vrot.lane.b32.xlu0 %v692, 32
    %v695 = vpop.permute.xlu0 %694
    %v697 = vadd.f32 %v687, %v695
    %v698 = vtanh.pop %v697
    %700 = vrot.lane.b32.xlu0 %v698, 64
    %v701 = vpop.permute.xlu0 %700
    %v703 = vmul.f32 %v686, %v701
    %705 = vrot.lane.b32.xlu0 %v703, 32
    %v706 = vpop.permute.xlu0 %705
    %v707 = vsel %vm75, %v706, 0
    %709 = vmatprep.subr.mxu0 %v201
    %710 = vmatpush1.msra.mxu0 %v200
    %711 = vmatprep.subr.mxu0 %v203
    %712 = vmatpush1.msra.mxu0 %v202
    %713 = vmatprep.subr.mxu0 %v205
    %714 = vmatpush1.msra.mxu0 %v204
    %715 = vmatprep.subr.mxu0 %v207
    %716 = vmatpush1.msra.mxu0 %v206
    %717 = vmatprep.subr.mxu0 0.0
    %718 = vmatpush1.msra.mxu0 0.0
    %719 = vmatprep.subr.mxu0 0.0
    %720 = vmatpush1.msra.mxu0 0.0
    %721 = vmatprep.subr.mxu0 0.0
    %722 = vmatpush1.msra.mxu0 0.0
    %723 = vmatprep.subr.mxu0 0.0
    %724 = vmatpush1.msra.mxu0 0.0
    %725 = vmatprep.subr.mxu0 0.0
    %726 = vmatpush1.msra.mxu0 0.0
    %727 = vmatprep.subr.mxu0 0.0
    %728 = vmatpush1.msra.mxu0 0.0
    %729 = vmatprep.subr.mxu0 0.0
    %730 = vmatpush1.msra.mxu0 0.0
    %731 = vmatprep.subr.mxu0 0.0
    %732 = vmatpush1.msra.mxu0 0.0
    %733 = vmatprep.subr.mxu0 0.0
    %734 = vmatpush1.msra.mxu0 0.0
    %735 = vmatprep.subr.mxu0 0.0
    %736 = vmatpush1.msra.mxu0 0.0
    %737 = vmatprep.subr.mxu0 0.0
    %738 = vmatpush1.msra.mxu0 0.0
    %739 = vmatprep.subr.mxu0 0.0
    %740 = vmatpush1.msra.mxu0 0.0
    %741 = vmatprep.subr.mxu0 0.0
    %742 = vmatpush1.msra.mxu0 0.0
    %743 = vmatprep.subr.mxu0 0.0
    %744 = vmatpush1.msra.mxu0 0.0
    %745 = vmatprep.subr.mxu0 0.0
    %746 = vmatpush1.msra.mxu0 0.0
    %747 = vmatprep.subr.mxu0 0.0
    %748 = vmatpush1.msra.mxu0 0.0
    %749 = vmatprep.subr.mxu0 0.0
    %750 = vmatpush1.msra.mxu0 0.0
    %751 = vmatprep.subr.mxu0 0.0
    %752 = vmatpush1.msra.mxu0 0.0
    %753 = vmatprep.subr.mxu0 0.0
    %754 = vmatpush1.msra.mxu0 0.0
    %755 = vmatprep.subr.mxu0 0.0
    %756 = vmatpush1.msra.mxu0 0.0
    %757 = vmatprep.subr.mxu0 0.0
    %758 = vmatpush1.msra.mxu0 0.0
    %759 = vmatprep.subr.mxu0 0.0
    %760 = vmatpush1.msra.mxu0 0.0
    %761 = vmatprep.subr.mxu0 0.0
    %762 = vmatpush1.msra.mxu0 0.0
    %763 = vmatprep.subr.mxu0 0.0
    %764 = vmatpush1.msra.mxu0 0.0
    %765 = vmatprep.subr.mxu0 0.0
    %766 = vmatpush1.msra.mxu0 0.0
    %767 = vmatprep.subr.mxu0 0.0
    %768 = vmatpush1.msra.mxu0 0.0
    %769 = vmatprep.subr.mxu0 0.0
    %770 = vmatpush1.msra.mxu0 0.0
    %771 = vmatprep.subr.mxu0 0.0
    %772 = vmatpush1.msra.mxu0 0.0
    %773 = vmatprep.mubr.f32.mxu0 0.0
    %774 = vmatmul.mubr.f32.gmra.mrb[0].mxu0 %v707
    %v775 = vpop.f32.mrb[0].mxu0
    %v776 = vadd.f32 0.0, %v775
    %v777 = vpop.f32.mrb[0].mxu0
    %v778 = vadd.f32 0.0, %v777
    %779 = vdwg.mxu0
    %v780 = vsel %vm210, %v776, %v778
    %v781 = vld [vmem:[%s191] sm:$0xff]
    %v782 = vadd.f32 %v780, %v781
    %v783 = vtanh.pop %v782
    %v784 = vmul.f32 %v783, 0.5
    %v785 = vadd.f32 %v784, 0.5
    %v786 = vmul.f32 %v785, %v697
    %788 = vrot.lane.b32.xlu0 %v783, 64
    %v789 = vpop.permute.xlu0 %788
    %v791 = vmul.f32 %v785, %v789
    %793 = vrot.lane.b32.xlu0 %v791, 32
    %v794 = vpop.permute.xlu0 %793
    %v796 = vadd.f32 %v786, %v794
    %v797 = vtanh.pop %v796
    %799 = vrot.lane.b32.xlu0 %v797, 64
    %v800 = vpop.permute.xlu0 %799
    %v802 = vmul.f32 %v785, %v800
    %804 = vrot.lane.b32.xlu0 %v802, 32
    %v805 = vpop.permute.xlu0 %804
    %v806 = vsel %vm75, %v805, 0
    %808 = vmatprep.subr.mxu0 %v201
    %809 = vmatpush1.msra.mxu0 %v200
    %810 = vmatprep.subr.mxu0 %v203
    %811 = vmatpush1.msra.mxu0 %v202
    %812 = vmatprep.subr.mxu0 %v205
    %813 = vmatpush1.msra.mxu0 %v204
    %814 = vmatprep.subr.mxu0 %v207
    %815 = vmatpush1.msra.mxu0 %v206
    %816 = vmatprep.subr.mxu0 0.0
    %817 = vmatpush1.msra.mxu0 0.0
    %818 = vmatprep.subr.mxu0 0.0
    %819 = vmatpush1.msra.mxu0 0.0
    %820 = vmatprep.subr.mxu0 0.0
    %821 = vmatpush1.msra.mxu0 0.0
    %822 = vmatprep.subr.mxu0 0.0
    %823 = vmatpush1.msra.mxu0 0.0
    %824 = vmatprep.subr.mxu0 0.0
    %825 = vmatpush1.msra.mxu0 0.0
    %826 = vmatprep.subr.mxu0 0.0
    %827 = vmatpush1.msra.mxu0 0.0
    %828 = vmatprep.subr.mxu0 0.0
    %829 = vmatpush1.msra.mxu0 0.0
    %830 = vmatprep.subr.mxu0 0.0
    %831 = vmatpush1.msra.mxu0 0.0
    %832 = vmatprep.subr.mxu0 0.0
    %833 = vmatpush1.msra.mxu0 0.0
    %834 = vmatprep.subr.mxu0 0.0
    %835 = vmatpush1.msra.mxu0 0.0
    %836 = vmatprep.subr.mxu0 0.0
    %837 = vmatpush1.msra.mxu0 0.0
    %838 = vmatprep.subr.mxu0 0.0
    %839 = vmatpush1.msra.mxu0 0.0
    %840 = vmatprep.subr.mxu0 0.0
    %841 = vmatpush1.msra.mxu0 0.0
    %842 = vmatprep.subr.mxu0 0.0
    %843 = vmatpush1.msra.mxu0 0.0
    %844 = vmatprep.subr.mxu0 0.0
    %845 = vmatpush1.msra.mxu0 0.0
    %846 = vmatprep.subr.mxu0 0.0
    %847 = vmatpush1.msra.mxu0 0.0
    %848 = vmatprep.subr.mxu0 0.0
    %849 = vmatpush1.msra.mxu0 0.0
    %850 = vmatprep.subr.mxu0 0.0
    %851 = vmatpush1.msra.mxu0 0.0
    %852 = vmatprep.subr.mxu0 0.0
    %853 = vmatpush1.msra.mxu0 0.0
    %854 = vmatprep.subr.mxu0 0.0
    %855 = vmatpush1.msra.mxu0 0.0
    %856 = vmatprep.subr.mxu0 0.0
    %857 = vmatpush1.msra.mxu0 0.0
    %858 = vmatprep.subr.mxu0 0.0
    %859 = vmatpush1.msra.mxu0 0.0
    %860 = vmatprep.subr.mxu0 0.0
    %861 = vmatpush1.msra.mxu0 0.0
    %862 = vmatprep.subr.mxu0 0.0
    %863 = vmatpush1.msra.mxu0 0.0
    %864 = vmatprep.subr.mxu0 0.0
    %865 = vmatpush1.msra.mxu0 0.0
    %866 = vmatprep.subr.mxu0 0.0
    %867 = vmatpush1.msra.mxu0 0.0
    %868 = vmatprep.subr.mxu0 0.0
    %869 = vmatpush1.msra.mxu0 0.0
    %870 = vmatprep.subr.mxu0 0.0
    %871 = vmatpush1.msra.mxu0 0.0
    %872 = vmatprep.mubr.f32.mxu0 0.0
    %873 = vmatmul.mubr.f32.gmra.mrb[0].mxu0 %v806
    %v874 = vpop.f32.mrb[0].mxu0
    %v875 = vadd.f32 0.0, %v874
    %v876 = vpop.f32.mrb[0].mxu0
    %v877 = vadd.f32 0.0, %v876
    %878 = vdwg.mxu0
    %v879 = vsel %vm210, %v875, %v877
    %v880 = vld [vmem:[%s194] sm:$0xff]
    %v881 = vadd.f32 %v879, %v880
    %v882 = vtanh.pop %v881
    %v883 = vmul.f32 %v882, 0.5
    %v884 = vadd.f32 %v883, 0.5
    %v885 = vmul.f32 %v884, %v796
    %887 = vrot.lane.b32.xlu0 %v882, 64
    %v888 = vpop.permute.xlu0 %887
    %v890 = vmul.f32 %v884, %v888
    %892 = vrot.lane.b32.xlu0 %v890, 32
    %v893 = vpop.permute.xlu0 %892
    %v895 = vadd.f32 %v885, %v893
    %v896 = vtanh.pop %v895
    %898 = vrot.lane.b32.xlu0 %v896, 64
    %v899 = vpop.permute.xlu0 %898
    %v901 = vmul.f32 %v884, %v899
    %903 = vrot.lane.b32.xlu0 %v901, 32
    %v904 = vpop.permute.xlu0 %903
    %v905 = vsel %vm75, %v904, 0
    %907 = vmatprep.subr.mxu0 %v201
    %908 = vmatpush1.msra.mxu0 %v200
    %909 = vmatprep.subr.mxu0 %v203
    %910 = vmatpush1.msra.mxu0 %v202
    %911 = vmatprep.subr.mxu0 %v205
    %912 = vmatpush1.msra.mxu0 %v204
    %913 = vmatprep.subr.mxu0 %v207
    %914 = vmatpush1.msra.mxu0 %v206
    %915 = vmatprep.subr.mxu0 0.0
    %916 = vmatpush1.msra.mxu0 0.0
    %917 = vmatprep.subr.mxu0 0.0
    %918 = vmatpush1.msra.mxu0 0.0
    %919 = vmatprep.subr.mxu0 0.0
    %920 = vmatpush1.msra.mxu0 0.0
    %921 = vmatprep.subr.mxu0 0.0
    %922 = vmatpush1.msra.mxu0 0.0
    %923 = vmatprep.subr.mxu0 0.0
    %924 = vmatpush1.msra.mxu0 0.0
    %925 = vmatprep.subr.mxu0 0.0
    %926 = vmatpush1.msra.mxu0 0.0
    %927 = vmatprep.subr.mxu0 0.0
    %928 = vmatpush1.msra.mxu0 0.0
    %929 = vmatprep.subr.mxu0 0.0
    %930 = vmatpush1.msra.mxu0 0.0
    %931 = vmatprep.subr.mxu0 0.0
    %932 = vmatpush1.msra.mxu0 0.0
    %933 = vmatprep.subr.mxu0 0.0
    %934 = vmatpush1.msra.mxu0 0.0
    %935 = vmatprep.subr.mxu0 0.0
    %936 = vmatpush1.msra.mxu0 0.0
    %937 = vmatprep.subr.mxu0 0.0
    %938 = vmatpush1.msra.mxu0 0.0
    %939 = vmatprep.subr.mxu0 0.0
    %940 = vmatpush1.msra.mxu0 0.0
    %941 = vmatprep.subr.mxu0 0.0
    %942 = vmatpush1.msra.mxu0 0.0
    %943 = vmatprep.subr.mxu0 0.0
    %944 = vmatpush1.msra.mxu0 0.0
    %945 = vmatprep.subr.mxu0 0.0
    %946 = vmatpush1.msra.mxu0 0.0
    %947 = vmatprep.subr.mxu0 0.0
    %948 = vmatpush1.msra.mxu0 0.0
    %949 = vmatprep.subr.mxu0 0.0
    %950 = vmatpush1.msra.mxu0 0.0
    %951 = vmatprep.subr.mxu0 0.0
    %952 = vmatpush1.msra.mxu0 0.0
    %953 = vmatprep.subr.mxu0 0.0
    %954 = vmatpush1.msra.mxu0 0.0
    %955 = vmatprep.subr.mxu0 0.0
    %956 = vmatpush1.msra.mxu0 0.0
    %957 = vmatprep.subr.mxu0 0.0
    %958 = vmatpush1.msra.mxu0 0.0
    %959 = vmatprep.subr.mxu0 0.0
    %960 = vmatpush1.msra.mxu0 0.0
    %961 = vmatprep.subr.mxu0 0.0
    %962 = vmatpush1.msra.mxu0 0.0
    %963 = vmatprep.subr.mxu0 0.0
    %964 = vmatpush1.msra.mxu0 0.0
    %965 = vmatprep.subr.mxu0 0.0
    %966 = vmatpush1.msra.mxu0 0.0
    %967 = vmatprep.subr.mxu0 0.0
    %968 = vmatpush1.msra.mxu0 0.0
    %969 = vmatprep.subr.mxu0 0.0
    %970 = vmatpush1.msra.mxu0 0.0
    %971 = vmatprep.mubr.f32.mxu0 0.0
    %972 = vmatmul.mubr.f32.gmra.mrb[0].mxu0 %v905
    %v973 = vpop.f32.mrb[0].mxu0
    %v974 = vadd.f32 0.0, %v973
    %v975 = vpop.f32.mrb[0].mxu0
    %v976 = vadd.f32 0.0, %v975
    %977 = vdwg.mxu0
    %v978 = vsel %vm210, %v974, %v976
    %v979 = vld [vmem:[%s197] sm:$0xff]
    %v980 = vadd.f32 %v978, %v979
    %v981 = vtanh.pop %v980
    %v982 = vmul.f32 %v981, 0.5
    %v983 = vadd.f32 %v982, 0.5
    %v984 = vmul.f32 %v983, %v895
    %986 = vrot.lane.b32.xlu0 %v981, 64
    %v987 = vpop.permute.xlu0 %986
    %v989 = vmul.f32 %v983, %v987
    %991 = vrot.lane.b32.xlu0 %v989, 32
    %v992 = vpop.permute.xlu0 %991
    %v994 = vadd.f32 %v984, %v992
    %v995 = vtanh.pop %v994
    %997 = vrot.lane.b32.xlu0 %v995, 64
    %v998 = vpop.permute.xlu0 %997
    %v1000 = vmul.f32 %v983, %v998
    %v1001 = vld [vmem:[%s5] sm:$0xff]
    %v1002 = vld [vmem:[%s5 + $0x8] sm:$0xff]
    %v1003 = vld [vmem:[%s5 + $0x10] sm:$0xff]
    %v1004 = vld [vmem:[%s5 + $0x18] sm:$0xff]
    %v1005 = vld [vmem:[%s6] sm:$0xff]
    %v1006 = vld [vmem:[%s6 + $0x8] sm:$0xff]
    %v1007 = vld [vmem:[%s6 + $0x10] sm:$0xff]
    %v1008 = vld [vmem:[%s6 + $0x18] sm:$0xff]
    %v1010 = vrot.slane %v1000, 4
    %1011 = vrot.lane.b32.xlu0 %v1010, 32
    %v1012 = vpop.permute.xlu0 %1011
    %v1013 = vsel %vm75, %v1012, 0
    %1015 = vmatprep.subr.mxu0 0.0
    %1016 = vmatpush1.msra.mxu0 %v1005
    %1017 = vmatprep.subr.mxu0 0.0
    %1018 = vmatpush1.msra.mxu0 %v1006
    %1019 = vmatprep.subr.mxu0 0.0
    %1020 = vmatpush1.msra.mxu0 %v1007
    %1021 = vmatprep.subr.mxu0 0.0
    %1022 = vmatpush1.msra.mxu0 %v1008
    %1023 = vmatprep.subr.mxu0 0.0
    %1024 = vmatpush1.msra.mxu0 0.0
    %1025 = vmatprep.subr.mxu0 0.0
    %1026 = vmatpush1.msra.mxu0 0.0
    %1027 = vmatprep.subr.mxu0 0.0
    %1028 = vmatpush1.msra.mxu0 0.0
    %1029 = vmatprep.subr.mxu0 0.0
    %1030 = vmatpush1.msra.mxu0 0.0
    %1031 = vmatprep.subr.mxu0 0.0
    %1032 = vmatpush1.msra.mxu0 0.0
    %1033 = vmatprep.subr.mxu0 0.0
    %1034 = vmatpush1.msra.mxu0 0.0
    %1035 = vmatprep.subr.mxu0 0.0
    %1036 = vmatpush1.msra.mxu0 0.0
    %1037 = vmatprep.subr.mxu0 0.0
    %1038 = vmatpush1.msra.mxu0 0.0
    %1039 = vmatprep.subr.mxu0 0.0
    %1040 = vmatpush1.msra.mxu0 0.0
    %1041 = vmatprep.subr.mxu0 0.0
    %1042 = vmatpush1.msra.mxu0 0.0
    %1043 = vmatprep.subr.mxu0 0.0
    %1044 = vmatpush1.msra.mxu0 0.0
    %1045 = vmatprep.subr.mxu0 0.0
    %1046 = vmatpush1.msra.mxu0 0.0
    %1047 = vmatprep.subr.mxu0 0.0
    %1048 = vmatpush1.msra.mxu0 0.0
    %1049 = vmatprep.subr.mxu0 0.0
    %1050 = vmatpush1.msra.mxu0 0.0
    %1051 = vmatprep.subr.mxu0 0.0
    %1052 = vmatpush1.msra.mxu0 0.0
    %1053 = vmatprep.subr.mxu0 0.0
    %1054 = vmatpush1.msra.mxu0 0.0
    %1055 = vmatprep.subr.mxu0 0.0
    %1056 = vmatpush1.msra.mxu0 0.0
    %1057 = vmatprep.subr.mxu0 0.0
    %1058 = vmatpush1.msra.mxu0 0.0
    %1059 = vmatprep.subr.mxu0 0.0
    %1060 = vmatpush1.msra.mxu0 0.0
    %1061 = vmatprep.subr.mxu0 0.0
    %1062 = vmatpush1.msra.mxu0 0.0
    %1063 = vmatprep.subr.mxu0 0.0
    %1064 = vmatpush1.msra.mxu0 0.0
    %1065 = vmatprep.subr.mxu0 0.0
    %1066 = vmatpush1.msra.mxu0 0.0
    %1067 = vmatprep.subr.mxu0 0.0
    %1068 = vmatpush1.msra.mxu0 0.0
    %1069 = vmatprep.subr.mxu0 0.0
    %1070 = vmatpush1.msra.mxu0 0.0
    %1071 = vmatprep.subr.mxu0 0.0
    %1072 = vmatpush1.msra.mxu0 0.0
    %1073 = vmatprep.subr.mxu0 0.0
    %1074 = vmatpush1.msra.mxu0 0.0
    %1075 = vmatprep.subr.mxu0 0.0
    %1076 = vmatpush1.msra.mxu0 0.0
    %1077 = vmatprep.subr.mxu0 0.0
    %1078 = vmatpush1.msra.mxu0 0.0
    %1079 = vmatprep.mubr.f32.mxu0 0.0
    %1080 = vmatmul.mubr.f32.gmra.mrb[0].mxu0 %v1013
    %v1081 = vpop.f32.mrb[0].mxu0
    %v1082 = vadd.f32 0.0, %v1081
    %v1083 = vpop.f32.mrb[0].mxu0
    %1084 = vdwg.mxu0
    %1085 = vrot.lane.b32.xlu0 %v1000, 32
    %v1086 = vpop.permute.xlu0 %1085
    %v1087 = vsel %vm75, %v1086, 0
    %1089 = vmatprep.subr.mxu0 0.0
    %1090 = vmatpush1.msra.mxu0 %v1001
    %1091 = vmatprep.subr.mxu0 0.0
    %1092 = vmatpush1.msra.mxu0 %v1002
    %1093 = vmatprep.subr.mxu0 0.0
    %1094 = vmatpush1.msra.mxu0 %v1003
    %1095 = vmatprep.subr.mxu0 0.0
    %1096 = vmatpush1.msra.mxu0 %v1004
    %1097 = vmatprep.subr.mxu0 0.0
    %1098 = vmatpush1.msra.mxu0 0.0
    %1099 = vmatprep.subr.mxu0 0.0
    %1100 = vmatpush1.msra.mxu0 0.0
    %1101 = vmatprep.subr.mxu0 0.0
    %1102 = vmatpush1.msra.mxu0 0.0
    %1103 = vmatprep.subr.mxu0 0.0
    %1104 = vmatpush1.msra.mxu0 0.0
    %1105 = vmatprep.subr.mxu0 0.0
    %1106 = vmatpush1.msra.mxu0 0.0
    %1107 = vmatprep.subr.mxu0 0.0
    %1108 = vmatpush1.msra.mxu0 0.0
    %1109 = vmatprep.subr.mxu0 0.0
    %1110 = vmatpush1.msra.mxu0 0.0
    %1111 = vmatprep.subr.mxu0 0.0
    %1112 = vmatpush1.msra.mxu0 0.0
    %1113 = vmatprep.subr.mxu0 0.0
    %1114 = vmatpush1.msra.mxu0 0.0
    %1115 = vmatprep.subr.mxu0 0.0
    %1116 = vmatpush1.msra.mxu0 0.0
    %1117 = vmatprep.subr.mxu0 0.0
    %1118 = vmatpush1.msra.mxu0 0.0
    %1119 = vmatprep.subr.mxu0 0.0
    %1120 = vmatpush1.msra.mxu0 0.0
    %1121 = vmatprep.subr.mxu0 0.0
    %1122 = vmatpush1.msra.mxu0 0.0
    %1123 = vmatprep.subr.mxu0 0.0
    %1124 = vmatpush1.msra.mxu0 0.0
    %1125 = vmatprep.subr.mxu0 0.0
    %1126 = vmatpush1.msra.mxu0 0.0
    %1127 = vmatprep.subr.mxu0 0.0
    %1128 = vmatpush1.msra.mxu0 0.0
    %1129 = vmatprep.subr.mxu0 0.0
    %1130 = vmatpush1.msra.mxu0 0.0
    %1131 = vmatprep.subr.mxu0 0.0
    %1132 = vmatpush1.msra.mxu0 0.0
    %1133 = vmatprep.subr.mxu0 0.0
    %1134 = vmatpush1.msra.mxu0 0.0
    %1135 = vmatprep.subr.mxu0 0.0
    %1136 = vmatpush1.msra.mxu0 0.0
    %1137 = vmatprep.subr.mxu0 0.0
    %1138 = vmatpush1.msra.mxu0 0.0
    %1139 = vmatprep.subr.mxu0 0.0
    %1140 = vmatpush1.msra.mxu0 0.0
    %1141 = vmatprep.subr.mxu0 0.0
    %1142 = vmatpush1.msra.mxu0 0.0
    %1143 = vmatprep.subr.mxu0 0.0
    %1144 = vmatpush1.msra.mxu0 0.0
    %1145 = vmatprep.subr.mxu0 0.0
    %1146 = vmatpush1.msra.mxu0 0.0
    %1147 = vmatprep.subr.mxu0 0.0
    %1148 = vmatpush1.msra.mxu0 0.0
    %1149 = vmatprep.subr.mxu0 0.0
    %1150 = vmatpush1.msra.mxu0 0.0
    %1151 = vmatprep.subr.mxu0 0.0
    %1152 = vmatpush1.msra.mxu0 0.0
    %1153 = vmatprep.mubr.f32.mxu0 0.0
    %1154 = vmatmul.mubr.f32.gmra.mrb[0].mxu0 %v1087
    %v1155 = vpop.f32.mrb[0].mxu0
    %v1156 = vadd.f32 %v1082, %v1155
    %v1157 = vpop.f32.mrb[0].mxu0
    %1158 = vdwg.mxu0
    %v1159 = vld [vmem:[%s1] sm:$0xf]
    %v1160 = vld [vmem:[%s7] sm:$0xff]
    %vm1161 = vcmask 64512
    %v1163 = vsel %vm1161, %v1159, 0
    %1165 = vmatprep.subr.mxu0 0.0
    %1166 = vmatpush1.msra.mxu0 %v1160
    %1167 = vmatprep.subr.mxu0 0.0
    %1168 = vmatpush1.msra.mxu0 0.0
    %1169 = vmatprep.subr.mxu0 0.0
    %1170 = vmatpush1.msra.mxu0 0.0
    %1171 = vmatprep.subr.mxu0 0.0
    %1172 = vmatpush1.msra.mxu0 0.0
    %1173 = vmatprep.subr.mxu0 0.0
    %1174 = vmatpush1.msra.mxu0 0.0
    %1175 = vmatprep.subr.mxu0 0.0
    %1176 = vmatpush1.msra.mxu0 0.0
    %1177 = vmatprep.subr.mxu0 0.0
    %1178 = vmatpush1.msra.mxu0 0.0
    %1179 = vmatprep.subr.mxu0 0.0
    %1180 = vmatpush1.msra.mxu0 0.0
    %1181 = vmatprep.subr.mxu0 0.0
    %1182 = vmatpush1.msra.mxu0 0.0
    %1183 = vmatprep.subr.mxu0 0.0
    %1184 = vmatpush1.msra.mxu0 0.0
    %1185 = vmatprep.subr.mxu0 0.0
    %1186 = vmatpush1.msra.mxu0 0.0
    %1187 = vmatprep.subr.mxu0 0.0
    %1188 = vmatpush1.msra.mxu0 0.0
    %1189 = vmatprep.subr.mxu0 0.0
    %1190 = vmatpush1.msra.mxu0 0.0
    %1191 = vmatprep.subr.mxu0 0.0
    %1192 = vmatpush1.msra.mxu0 0.0
    %1193 = vmatprep.subr.mxu0 0.0
    %1194 = vmatpush1.msra.mxu0 0.0
    %1195 = vmatprep.subr.mxu0 0.0
    %1196 = vmatpush1.msra.mxu0 0.0
    %1197 = vmatprep.subr.mxu0 0.0
    %1198 = vmatpush1.msra.mxu0 0.0
    %1199 = vmatprep.subr.mxu0 0.0
    %1200 = vmatpush1.msra.mxu0 0.0
    %1201 = vmatprep.subr.mxu0 0.0
    %1202 = vmatpush1.msra.mxu0 0.0
    %1203 = vmatprep.subr.mxu0 0.0
    %1204 = vmatpush1.msra.mxu0 0.0
    %1205 = vmatprep.subr.mxu0 0.0
    %1206 = vmatpush1.msra.mxu0 0.0
    %1207 = vmatprep.subr.mxu0 0.0
    %1208 = vmatpush1.msra.mxu0 0.0
    %1209 = vmatprep.subr.mxu0 0.0
    %1210 = vmatpush1.msra.mxu0 0.0
    %1211 = vmatprep.subr.mxu0 0.0
    %1212 = vmatpush1.msra.mxu0 0.0
    %1213 = vmatprep.subr.mxu0 0.0
    %1214 = vmatpush1.msra.mxu0 0.0
    %1215 = vmatprep.subr.mxu0 0.0
    %1216 = vmatpush1.msra.mxu0 0.0
    %1217 = vmatprep.subr.mxu0 0.0
    %1218 = vmatpush1.msra.mxu0 0.0
    %1219 = vmatprep.subr.mxu0 0.0
    %1220 = vmatpush1.msra.mxu0 0.0
    %1221 = vmatprep.subr.mxu0 0.0
    %1222 = vmatpush1.msra.mxu0 0.0
    %1223 = vmatprep.subr.mxu0 0.0
    %1224 = vmatpush1.msra.mxu0 0.0
    %1225 = vmatprep.subr.mxu0 0.0
    %1226 = vmatpush1.msra.mxu0 0.0
    %1227 = vmatprep.subr.mxu0 0.0
    %1228 = vmatpush1.msra.mxu0 0.0
    %1229 = vmatprep.mubr.f32.mxu0 0.0
    %1230 = vmatmul.mubr.f32.gmra.mrb[0].mxu0 %v1163
    %v1231 = vpop.f32.mrb[0].mxu0
    %v1232 = vadd.f32 0.0, %v1231
    %v1233 = vpop.f32.mrb[0].mxu0
    %1234 = vdwg.mxu0
    %v1235 = vadd.f32 %v1156, %v1232
    %v1236 = vld [vmem:[%s8] sm:$0x1]
    %v1238 = vlaneseq
    %v1239 = vshrl.u32 %v1238, 7
    %v1240 = vsub.s32 0, %v1239
    %v1241 = vrot.slane %v1236, %v1240
    %v1243 = vadd.f32 %v1235, %v1241
    %v1244 = vtanh.pop %v1243
    %v1245 = vld [vmem:[%s9] sm:$0xff]
    %v1246 = vld [vmem:[%s9 + $0x8] sm:$0xff]
    %v1247 = vld [vmem:[%s9 + $0x10] sm:$0xff]
    %v1248 = vld [vmem:[%s9 + $0x18] sm:$0xff]
    %v1249 = vld [vmem:[%s10] sm:$0x1]
    %v1251 = vlaneseq
    %v1252 = vshrl.u32 %v1251, 7
    %v1253 = vsub.s32 0, %v1252
    %v1254 = vrot.slane %v1249, %v1253
    %v1257 = vsel %vm75, %v1244, 0
    %1259 = vmatprep.subr.mxu0 0.0
    %1260 = vmatpush1.msra.mxu0 %v1245
    %1261 = vmatprep.subr.mxu0 0.0
    %1262 = vmatpush1.msra.mxu0 %v1246
    %1263 = vmatprep.subr.mxu0 0.0
    %1264 = vmatpush1.msra.mxu0 %v1247
    %1265 = vmatprep.subr.mxu0 0.0
    %1266 = vmatpush1.msra.mxu0 %v1248
    %1267 = vmatprep.subr.mxu0 0.0
    %1268 = vmatpush1.msra.mxu0 0.0
    %1269 = vmatprep.subr.mxu0 0.0
    %1270 = vmatpush1.msra.mxu0 0.0
    %1271 = vmatprep.subr.mxu0 0.0
    %1272 = vmatpush1.msra.mxu0 0.0
    %1273 = vmatprep.subr.mxu0 0.0
    %1274 = vmatpush1.msra.mxu0 0.0
    %1275 = vmatprep.subr.mxu0 0.0
    %1276 = vmatpush1.msra.mxu0 0.0
    %1277 = vmatprep.subr.mxu0 0.0
    %1278 = vmatpush1.msra.mxu0 0.0
    %1279 = vmatprep.subr.mxu0 0.0
    %1280 = vmatpush1.msra.mxu0 0.0
    %1281 = vmatprep.subr.mxu0 0.0
    %1282 = vmatpush1.msra.mxu0 0.0
    %1283 = vmatprep.subr.mxu0 0.0
    %1284 = vmatpush1.msra.mxu0 0.0
    %1285 = vmatprep.subr.mxu0 0.0
    %1286 = vmatpush1.msra.mxu0 0.0
    %1287 = vmatprep.subr.mxu0 0.0
    %1288 = vmatpush1.msra.mxu0 0.0
    %1289 = vmatprep.subr.mxu0 0.0
    %1290 = vmatpush1.msra.mxu0 0.0
    %1291 = vmatprep.subr.mxu0 0.0
    %1292 = vmatpush1.msra.mxu0 0.0
    %1293 = vmatprep.subr.mxu0 0.0
    %1294 = vmatpush1.msra.mxu0 0.0
    %1295 = vmatprep.subr.mxu0 0.0
    %1296 = vmatpush1.msra.mxu0 0.0
    %1297 = vmatprep.subr.mxu0 0.0
    %1298 = vmatpush1.msra.mxu0 0.0
    %1299 = vmatprep.subr.mxu0 0.0
    %1300 = vmatpush1.msra.mxu0 0.0
    %1301 = vmatprep.subr.mxu0 0.0
    %1302 = vmatpush1.msra.mxu0 0.0
    %1303 = vmatprep.subr.mxu0 0.0
    %1304 = vmatpush1.msra.mxu0 0.0
    %1305 = vmatprep.subr.mxu0 0.0
    %1306 = vmatpush1.msra.mxu0 0.0
    %1307 = vmatprep.subr.mxu0 0.0
    %1308 = vmatpush1.msra.mxu0 0.0
    %1309 = vmatprep.subr.mxu0 0.0
    %1310 = vmatpush1.msra.mxu0 0.0
    %1311 = vmatprep.subr.mxu0 0.0
    %1312 = vmatpush1.msra.mxu0 0.0
    %1313 = vmatprep.subr.mxu0 0.0
    %1314 = vmatpush1.msra.mxu0 0.0
    %1315 = vmatprep.subr.mxu0 0.0
    %1316 = vmatpush1.msra.mxu0 0.0
    %1317 = vmatprep.subr.mxu0 0.0
    %1318 = vmatpush1.msra.mxu0 0.0
    %1319 = vmatprep.subr.mxu0 0.0
    %1320 = vmatpush1.msra.mxu0 0.0
    %1321 = vmatprep.subr.mxu0 0.0
    %1322 = vmatpush1.msra.mxu0 0.0
    %1323 = vmatprep.mubr.f32.mxu0 0.0
    %1324 = vmatmul.mubr.f32.gmra.mrb[0].mxu0 %v1257
    %v1325 = vpop.f32.mrb[0].mxu0
    %v1326 = vadd.f32 %v1254, %v1325
    %v1327 = vpop.f32.mrb[0].mxu0
    %1328 = vdwg.mxu0
    %v1329 = vtanh.pop %v1326
    %v1330 = vld [vmem:[%s11] sm:$0xff]
    %v1331 = vld [vmem:[%s11 + $0x8] sm:$0xff]
    %v1332 = vld [vmem:[%s11 + $0x10] sm:$0xff]
    %v1333 = vld [vmem:[%s11 + $0x18] sm:$0xff]
    %v1334 = vld [vmem:[%s12] sm:$0x1]
    %v1336 = vlaneseq
    %v1337 = vshrl.u32 %v1336, 7
    %v1338 = vsub.s32 0, %v1337
    %v1339 = vrot.slane %v1334, %v1338
    %v1342 = vsel %vm75, %v1329, 0
    %1344 = vmatprep.subr.mxu0 0.0
    %1345 = vmatpush1.msra.mxu0 %v1330
    %1346 = vmatprep.subr.mxu0 0.0
    %1347 = vmatpush1.msra.mxu0 %v1331
    %1348 = vmatprep.subr.mxu0 0.0
    %1349 = vmatpush1.msra.mxu0 %v1332
    %1350 = vmatprep.subr.mxu0 0.0
    %1351 = vmatpush1.msra.mxu0 %v1333
    %1352 = vmatprep.subr.mxu0 0.0
    %1353 = vmatpush1.msra.mxu0 0.0
    %1354 = vmatprep.subr.mxu0 0.0
    %1355 = vmatpush1.msra.mxu0 0.0
    %1356 = vmatprep.subr.mxu0 0.0
    %1357 = vmatpush1.msra.mxu0 0.0
    %1358 = vmatprep.subr.mxu0 0.0
    %1359 = vmatpush1.msra.mxu0 0.0
    %1360 = vmatprep.subr.mxu0 0.0
    %1361 = vmatpush1.msra.mxu0 0.0
    %1362 = vmatprep.subr.mxu0 0.0
    %1363 = vmatpush1.msra.mxu0 0.0
    %1364 = vmatprep.subr.mxu0 0.0
    %1365 = vmatpush1.msra.mxu0 0.0
    %1366 = vmatprep.subr.mxu0 0.0
    %1367 = vmatpush1.msra.mxu0 0.0
    %1368 = vmatprep.subr.mxu0 0.0
    %1369 = vmatpush1.msra.mxu0 0.0
    %1370 = vmatprep.subr.mxu0 0.0
    %1371 = vmatpush1.msra.mxu0 0.0
    %1372 = vmatprep.subr.mxu0 0.0
    %1373 = vmatpush1.msra.mxu0 0.0
    %1374 = vmatprep.subr.mxu0 0.0
    %1375 = vmatpush1.msra.mxu0 0.0
    %1376 = vmatprep.subr.mxu0 0.0
    %1377 = vmatpush1.msra.mxu0 0.0
    %1378 = vmatprep.subr.mxu0 0.0
    %1379 = vmatpush1.msra.mxu0 0.0
    %1380 = vmatprep.subr.mxu0 0.0
    %1381 = vmatpush1.msra.mxu0 0.0
    %1382 = vmatprep.subr.mxu0 0.0
    %1383 = vmatpush1.msra.mxu0 0.0
    %1384 = vmatprep.subr.mxu0 0.0
    %1385 = vmatpush1.msra.mxu0 0.0
    %1386 = vmatprep.subr.mxu0 0.0
    %1387 = vmatpush1.msra.mxu0 0.0
    %1388 = vmatprep.subr.mxu0 0.0
    %1389 = vmatpush1.msra.mxu0 0.0
    %1390 = vmatprep.subr.mxu0 0.0
    %1391 = vmatpush1.msra.mxu0 0.0
    %1392 = vmatprep.subr.mxu0 0.0
    %1393 = vmatpush1.msra.mxu0 0.0
    %1394 = vmatprep.subr.mxu0 0.0
    %1395 = vmatpush1.msra.mxu0 0.0
    %1396 = vmatprep.subr.mxu0 0.0
    %1397 = vmatpush1.msra.mxu0 0.0
    %1398 = vmatprep.subr.mxu0 0.0
    %1399 = vmatpush1.msra.mxu0 0.0
    %1400 = vmatprep.subr.mxu0 0.0
    %1401 = vmatpush1.msra.mxu0 0.0
    %1402 = vmatprep.subr.mxu0 0.0
    %1403 = vmatpush1.msra.mxu0 0.0
    %1404 = vmatprep.subr.mxu0 0.0
    %1405 = vmatpush1.msra.mxu0 0.0
    %1406 = vmatprep.subr.mxu0 0.0
    %1407 = vmatpush1.msra.mxu0 0.0
    %1408 = vmatprep.mubr.f32.mxu0 0.0
    %1409 = vmatmul.mubr.f32.gmra.mrb[0].mxu0 %v1342
    %v1410 = vpop.f32.mrb[0].mxu0
    %v1411 = vadd.f32 %v1339, %v1410
    %v1412 = vpop.f32.mrb[0].mxu0
    %1413 = vdwg.mxu0
    %v1414 = vtanh.pop %v1411
    %v1415 = vld [vmem:[%s13] sm:$0xff]
    %v1416 = vld [vmem:[%s13 + $0x8] sm:$0xff]
    %v1417 = vld [vmem:[%s13 + $0x10] sm:$0xff]
    %v1418 = vld [vmem:[%s13 + $0x18] sm:$0xff]
    %v1419 = vld [vmem:[%s14] sm:$0x1]
    %v1421 = vlaneseq
    %v1422 = vshrl.u32 %v1421, 7
    %v1423 = vsub.s32 0, %v1422
    %v1424 = vrot.slane %v1419, %v1423
    %v1427 = vsel %vm75, %v1414, 0
    %1429 = vmatprep.subr.mxu0 0.0
    %1430 = vmatpush1.msra.mxu0 %v1415
    %1431 = vmatprep.subr.mxu0 0.0
    %1432 = vmatpush1.msra.mxu0 %v1416
    %1433 = vmatprep.subr.mxu0 0.0
    %1434 = vmatpush1.msra.mxu0 %v1417
    %1435 = vmatprep.subr.mxu0 0.0
    %1436 = vmatpush1.msra.mxu0 %v1418
    %1437 = vmatprep.subr.mxu0 0.0
    %1438 = vmatpush1.msra.mxu0 0.0
    %1439 = vmatprep.subr.mxu0 0.0
    %1440 = vmatpush1.msra.mxu0 0.0
    %1441 = vmatprep.subr.mxu0 0.0
    %1442 = vmatpush1.msra.mxu0 0.0
    %1443 = vmatprep.subr.mxu0 0.0
    %1444 = vmatpush1.msra.mxu0 0.0
    %1445 = vmatprep.subr.mxu0 0.0
    %1446 = vmatpush1.msra.mxu0 0.0
    %1447 = vmatprep.subr.mxu0 0.0
    %1448 = vmatpush1.msra.mxu0 0.0
    %1449 = vmatprep.subr.mxu0 0.0
    %1450 = vmatpush1.msra.mxu0 0.0
    %1451 = vmatprep.subr.mxu0 0.0
    %1452 = vmatpush1.msra.mxu0 0.0
    %1453 = vmatprep.subr.mxu0 0.0
    %1454 = vmatpush1.msra.mxu0 0.0
    %1455 = vmatprep.subr.mxu0 0.0
    %1456 = vmatpush1.msra.mxu0 0.0
    %1457 = vmatprep.subr.mxu0 0.0
    %1458 = vmatpush1.msra.mxu0 0.0
    %1459 = vmatprep.subr.mxu0 0.0
    %1460 = vmatpush1.msra.mxu0 0.0
    %1461 = vmatprep.subr.mxu0 0.0
    %1462 = vmatpush1.msra.mxu0 0.0
    %1463 = vmatprep.subr.mxu0 0.0
    %1464 = vmatpush1.msra.mxu0 0.0
    %1465 = vmatprep.subr.mxu0 0.0
    %1466 = vmatpush1.msra.mxu0 0.0
    %1467 = vmatprep.subr.mxu0 0.0
    %1468 = vmatpush1.msra.mxu0 0.0
    %1469 = vmatprep.subr.mxu0 0.0
    %1470 = vmatpush1.msra.mxu0 0.0
    %1471 = vmatprep.subr.mxu0 0.0
    %1472 = vmatpush1.msra.mxu0 0.0
    %1473 = vmatprep.subr.mxu0 0.0
    %1474 = vmatpush1.msra.mxu0 0.0
    %1475 = vmatprep.subr.mxu0 0.0
    %1476 = vmatpush1.msra.mxu0 0.0
    %1477 = vmatprep.subr.mxu0 0.0
    %1478 = vmatpush1.msra.mxu0 0.0
    %1479 = vmatprep.subr.mxu0 0.0
    %1480 = vmatpush1.msra.mxu0 0.0
    %1481 = vmatprep.subr.mxu0 0.0
    %1482 = vmatpush1.msra.mxu0 0.0
    %1483 = vmatprep.subr.mxu0 0.0
    %1484 = vmatpush1.msra.mxu0 0.0
    %1485 = vmatprep.subr.mxu0 0.0
    %1486 = vmatpush1.msra.mxu0 0.0
    %1487 = vmatprep.subr.mxu0 0.0
    %1488 = vmatpush1.msra.mxu0 0.0
    %1489 = vmatprep.subr.mxu0 0.0
    %1490 = vmatpush1.msra.mxu0 0.0
    %1491 = vmatprep.subr.mxu0 0.0
    %1492 = vmatpush1.msra.mxu0 0.0
    %1493 = vmatprep.mubr.f32.mxu0 0.0
    %1494 = vmatmul.mubr.f32.gmra.mrb[0].mxu0 %v1427
    %v1495 = vpop.f32.mrb[0].mxu0
    %v1496 = vadd.f32 %v1424, %v1495
    %v1497 = vpop.f32.mrb[0].mxu0
    %1498 = vdwg.mxu0
    %vm1499 = vcmask 27648
    %1500 = vst.msk [vmem:[#allocation3] sm:$0xf] %vm1499, %v1496
    // Predicated region
    $region62: #{lstm_attention_forward.1} parent=1 // pred_check
      _
    $region63: #{lstm_attention_forward.1} parent=1 // pred_check_branch
      %1502 = sbr.rel (0) target = $region65
    $region64: #{lstm_attention_forward.1} parent=1 // pred_region
      %s1504 = ssub.s32 64, 64
      %1505 = vsyncadd [#allocation4], %s1504
      %s1507 = sshll.u32 [#allocation3], 4
      %s1508 = int_to_ptr.vmem [resolvable:$true] %s1507
      %1510 = dma.vmem_to_hbm [thread:$0]  %s1508, 64, %s15, [#allocation4]
    $region65: #{lstm_attention_forward.1} parent=1 // pred_fallthru
      _
    // Predicated region
    $region66: #{lstm_attention_forward.1} parent=1 // pred_check
      _
    $region67: #{lstm_attention_forward.1} parent=1 // pred_check_branch
      %1512 = sbr.rel (0) target = $region69
    $region68: #{lstm_attention_forward.1} parent=1 // pred_region
      %1513 = dma.done [#allocation4], 64
    $region69: #{lstm_attention_forward.1} parent=1 // pred_fallthru
      _
    %1514 = vsyncpa [#allocation4], 1

</llo_original>
